<compile_context>
chip_gen: v6e
topology: v6e:2x2x1
jax: 0.10.0
libtpu: 0.0.40
codegen_flags: <defaults>
</compile_context>

<pallas_src>
import math
import functools

import jax
import jax.numpy as jnp
from jax import lax
from jax.experimental import pallas as pl
from jax.experimental.pallas import tpu as pltpu


# ----------------------------------------------------------------------------
# Pallas kernel: whole LlamaBlock forward for one batch element
# ----------------------------------------------------------------------------
def llama_block_kernel(
    x_ref,        # (T, C)   f32   (batch dim squeezed via BlockSpec None-dim)
    ln1_w_ref,    # (1, C)   f32
    w_attn_ref,   # (C, 3C)  bf16  Q/K columns in rotate-half layout, Q pre-scaled by 1/sqrt(hd)
    b_attn_ref,   # (1, 3C)  f32   same permutation / scaling as w_attn
    w_proj_ref,   # (C, C)   bf16
    b_proj_ref,   # (1, C)   f32
    ln2_w_ref,    # (1, C)   f32
    w1_ref,       # (C, F)   bf16
    w2_ref,       # (C, F)   bf16
    wc_ref,       # (F, C)   bf16
    cos_ref,      # (T, hd)  f32   per-head cos, duplicated halves [c, c]
    sin_ref,      # (T, hd)  f32   per-head sin with rotate-half sign folded: [-s, s]
    mask_ref,     # (T, T)   f32   additive causal bias (0 on/below diag, -1e30 above)
    o_ref,        # (T, C)   f32
    *,
    n_head: int,
    eps: float,
):
    T, C = x_ref.shape
    hd = C // n_head
    hd2 = hd // 2
    f32 = jnp.float32
    bf16 = jnp.bfloat16

    x = x_ref[...]  # f32

    # ---------------- RMSNorm 1 (f32 elementwise; v5e has no bf16 VPU) -------
    ms = jnp.mean(x * x, axis=-1, keepdims=True)
    ln1 = (x * lax.rsqrt(ms + eps)) * ln1_w_ref[...]

    # ---------------- fused QKV projection: bf16 MXU operands, f32 accum -----
    qkv = jnp.dot(ln1.astype(bf16), w_attn_ref[...],
                  preferred_element_type=f32) + b_attn_ref[...]
    q = qkv[:, 0:C].reshape(T, n_head, hd)       # rotate-half layout, pre-scaled
    k = qkv[:, C:2 * C].reshape(T, n_head, hd)   # rotate-half layout
    v = qkv[:, 2 * C:3 * C].reshape(T, n_head, hd)

    # ---------------- rotary embedding (rotate-half layout) ------------------
    # Per head: [a; b] -> [a*cos - b*sin ; b*cos + a*sin].  The sign is folded
    # into sin_ref ([-s, s]), so the kernel does one half-swap + 2 mul + 1 add.
    cos = cos_ref[...][:, None, :]   # (T, 1, hd) broadcast over heads
    sin = sin_ref[...][:, None, :]

    def rope(t):                     # t: (T, n_head, hd)
        swapped = jnp.concatenate([t[:, :, hd2:], t[:, :, :hd2]], axis=-1)
        return t * cos + swapped * sin

    q = rope(q)
    k = rope(k)

    # ---------------- causal attention, batched over heads -------------------
    # Head axis moved to the leading (batch) position for the MXU einsums.
    # TODO(synk): at real Llama sizes, move the head axis to the grid and use
    # flash-style KV-tile streaming so the (h,T,T) scores are never materialized
    # and these relayouts disappear; also stream K/N tiles of the big weights.
    q3 = jnp.swapaxes(q, 0, 1).astype(bf16)      # (h, T, hd)
    k3 = jnp.swapaxes(k, 0, 1).astype(bf16)
    v3 = jnp.swapaxes(v, 0, 1).astype(bf16)

    s = jnp.einsum('htd,hsd->hts', q3, k3, preferred_element_type=f32)
    s = s + mask_ref[...][None, :, :]            # additive causal bias, one VPU add
    s = s - jnp.max(s, axis=-1, keepdims=True)
    p = jnp.exp(s)                               # EUP, f32
    l = jnp.sum(p, axis=-1, keepdims=True)       # (h, T, 1) f32

    y3 = jnp.einsum('hts,hsd->htd', p.astype(bf16), v3,
                    preferred_element_type=f32)
    # Normalize the small (h,T,hd) context; reciprocal goes to the EUP slot.
    y3 = y3 * pl.reciprocal(l, approx=True)
    y = jnp.swapaxes(y3, 0, 1).reshape(T, C)     # merge heads

    attn_out = jnp.dot(y.astype(bf16), w_proj_ref[...],
                       preferred_element_type=f32) + b_proj_ref[...]
    # TODO(synk): attn/resid dropout omitted (p=0 / eval mode).
    x1 = x + attn_out

    # ---------------- RMSNorm 2 ----------------------------------------------
    ms2 = jnp.mean(x1 * x1, axis=-1, keepdims=True)
    ln2 = (x1 * lax.rsqrt(ms2 + eps)) * ln2_w_ref[...]

    # ---------------- SwiGLU MLP: c_proj(silu(w1 x) * w2 x) -------------------
    ln2_b = ln2.astype(bf16)
    h1 = jnp.dot(ln2_b, w1_ref[...], preferred_element_type=f32)
    h2 = jnp.dot(ln2_b, w2_ref[...], preferred_element_type=f32)
    gated = (h1 * jax.nn.sigmoid(h1)) * h2       # SiLU kept in f32
    mlp = jnp.dot(gated.astype(bf16), wc_ref[...], preferred_element_type=f32)

    o_ref[...] = (x1 + mlp).astype(o_ref.dtype)


# ----------------------------------------------------------------------------
# One-time parameter preparation (bf16 cast, RoPE column permutation, scale fold)
# ----------------------------------------------------------------------------
def prepare_params(params, *, n_head):
    """Done ONCE at init time, not per call: bf16 MXU weights, rotate-half Q/K
    column permutation, 1/sqrt(hd) folded into the Q columns."""
    C = params['w_attn'].shape[0]
    hd = C // n_head
    hd2 = hd // 2
    scale = 1.0 / math.sqrt(hd)
    bf16 = jnp.bfloat16

    # new within-head column j takes old column [0,2,...,hd-2, 1,3,...,hd-1][j]
    j = jnp.arange(hd)
    old_in_head = jnp.where(j < hd2, 2 * j, 2 * (j - hd2) + 1)
    perm = (jnp.arange(n_head)[:, None] * hd + old_in_head[None, :]).reshape(-1)

    w_attn = params['w_attn']                      # (C, 3C)
    wq = w_attn[:, :C][:, perm] * scale
    wk = w_attn[:, C:2 * C][:, perm]
    wv = w_attn[:, 2 * C:]
    b_attn = params['b_attn']                      # (1, 3C)
    bq = b_attn[:, :C][:, perm] * scale
    bk = b_attn[:, C:2 * C][:, perm]
    bv = b_attn[:, 2 * C:]

    return {
        'ln1_w': params['ln1_w'],
        'w_attn': jnp.concatenate([wq, wk, wv], axis=1).astype(bf16),
        'b_attn': jnp.concatenate([bq, bk, bv], axis=1),
        'w_proj': params['w_proj'].astype(bf16),
        'b_proj': params['b_proj'],
        'ln2_w': params['ln2_w'],
        'w1': params['w1'].astype(bf16),
        'w2': params['w2'].astype(bf16),
        'wc': params['wc'].astype(bf16),
    }


def build_rope_tables(T, hd):
    """cos/sin tables in the rotate-half layout, sign folded into sin."""
    inv_freq = 1.0 / (10000.0 ** (jnp.arange(0, hd, 2, dtype=jnp.float32) / hd))
    ang = jnp.arange(T, dtype=jnp.float32)[:, None] * inv_freq[None, :]   # (T, hd/2)
    cos, sin = jnp.cos(ang), jnp.sin(ang)
    cos_dup = jnp.concatenate([cos, cos], axis=1)       # (T, hd)
    sin_signed = jnp.concatenate([-sin, sin], axis=1)   # (T, hd)
    return cos_dup, sin_signed


def build_causal_bias(T):
    tri = jnp.tril(jnp.ones((T, T), dtype=bool))
    return jnp.where(tri, 0.0, -1e30).astype(jnp.float32)


# ----------------------------------------------------------------------------
# Wrapper
# ----------------------------------------------------------------------------
def llama_block(x, prepared, cos_dup, sin_signed, causal_bias, *, n_head, eps=1e-6):
    B, T, C = x.shape
    F = prepared['w1'].shape[1]
    kernel = functools.partial(llama_block_kernel, n_head=n_head, eps=eps)

    operands = (x, prepared['ln1_w'], prepared['w_attn'], prepared['b_attn'],
                prepared['w_proj'], prepared['b_proj'], prepared['ln2_w'],
                prepared['w1'], prepared['w2'], prepared['wc'],
                cos_dup, sin_signed, causal_bias)

    def invariant(shape):
        # Grid-invariant operand: same block every step -> single buffer.
        n = len(shape)
        return pl.BlockSpec(shape, lambda b, _n=n: (0,) * _n,
                            pipeline_mode=pl.Buffered(1))

    in_specs = [
        pl.BlockSpec((None, T, C), lambda b: (b, 0, 0)),  # x (double buffered)
        invariant((1, C)),            # ln1 weight
        invariant((C, 3 * C)),        # c_attn weight (bf16, prepped)
        invariant((1, 3 * C)),        # c_attn bias (prepped)
        invariant((C, C)),            # attn c_proj weight (bf16)
        invariant((1, C)),            # attn c_proj bias
        invariant((1, C)),            # ln2 weight
        invariant((C, F)),            # mlp w1 (bf16)
        invariant((C, F)),            # mlp w2 (bf16)
        invariant((F, C)),            # mlp c_proj (bf16)
        invariant((T, C // n_head)),  # cos table
        invariant((T, C // n_head)),  # sin table (sign folded)
        invariant((T, T)),            # additive causal bias
    ]

    # VMEM budget: actual resident block bytes x buffer count, clamped to the
    # device's physical VMEM minus headroom (never exceeds v7x's 64 MiB).
    def nbytes(a):
        return int(a.size) * a.dtype.itemsize

    xb = T * C * x.dtype.itemsize
    resident_bytes = 2 * xb + 2 * xb + sum(nbytes(a) for a in operands[1:])
    try:
        vmem_cap = int(pltpu.get_tpu_info().vmem_capacity_bytes)
    except Exception:
        vmem_cap = 64 * 1024 * 1024   # conservative: v7x per-core VMEM
    vmem_limit = int(min(vmem_cap - (8 << 20),
                         max(32 << 20, 2 * resident_bytes + (16 << 20))))

    flops = B * (2 * T * C * 3 * C          # qkv projection
                 + 4 * T * T * C            # q@k^T + p@v over all heads
                 + 2 * T * C * C            # attn c_proj
                 + 4 * T * C * F            # mlp w1, w2
                 + 2 * T * F * C)           # mlp c_proj
    transcendentals = B * (n_head * T * T + T * F + n_head * T + 2 * T)
    bytes_accessed = sum(nbytes(a) for a in operands) + x.size * x.dtype.itemsize
    cost = pl.CostEstimate(flops=flops, transcendentals=transcendentals,
                           bytes_accessed=bytes_accessed)

    # NOTE(v7x): with "parallel" over B=2 each TensorCore keeps its own weight
    # copy resident; at real sizes shard heads / MLP-F across cores instead.
    return pl.pallas_call(
        kernel,
        out_shape=jax.ShapeDtypeStruct((B, T, C), x.dtype),
        grid=(B,),
        in_specs=in_specs,
        out_specs=pl.BlockSpec((None, T, C), lambda b: (b, 0, 0)),
        compiler_params=pltpu.CompilerParams(
            dimension_semantics=("parallel",),
            vmem_limit_bytes=vmem_limit),
        cost_estimate=cost,
    )(*operands)


# ----------------------------------------------------------------------------
# Plain-JAX reference (mirrors the PyTorch forward exactly, all-f32, original params)
# ----------------------------------------------------------------------------
def reference_block(x, params, cos, sin, *, n_head, eps=1e-6):
    B, T, C = x.shape
    hd = C // n_head

    def rmsnorm(z, w):
        ms = jnp.mean(z * z, axis=-1, keepdims=True)
        return z * lax.rsqrt(ms + eps) * w

    ln1 = rmsnorm(x, params['ln1_w'][0])
    qkv = ln1 @ params['w_attn'] + params['b_attn'][0]
    q, k, v = jnp.split(qkv, 3, axis=-1)
    q = q.reshape(B, T, n_head, hd)
    k = k.reshape(B, T, n_head, hd)
    v = v.reshape(B, T, n_head, hd)

    def rope(t):
        t2 = t.reshape(B, T, n_head, hd // 2, 2)
        c = cos[None, :, None, :]
        s = sin[None, :, None, :]
        tr = t2[..., 0] * c - t2[..., 1] * s
        ti = t2[..., 0] * s + t2[..., 1] * c
        return jnp.stack([tr, ti], axis=-1).reshape(B, T, n_head, hd)

    q, k = rope(q), rope(k)
    q = q.transpose(0, 2, 1, 3)
    k = k.transpose(0, 2, 1, 3)
    v = v.transpose(0, 2, 1, 3)
    att = jnp.einsum('bhtd,bhsd->bhts', q, k) / math.sqrt(hd)
    mask = jnp.tril(jnp.ones((T, T), dtype=bool))
    att = jnp.where(mask, att, -jnp.inf)
    att = jax.nn.softmax(att, axis=-1)
    y = jnp.einsum('bhts,bhsd->bhtd', att, v)
    y = y.transpose(0, 2, 1, 3).reshape(B, T, C)
    attn_out = y @ params['w_proj'] + params['b_proj'][0]
    x1 = x + attn_out

    ln2 = rmsnorm(x1, params['ln2_w'][0])
    h1 = ln2 @ params['w1']
    h2 = ln2 @ params['w2']
    mlp = (jax.nn.silu(h1) * h2) @ params['wc']
    return x1 + mlp


# ----------------------------------------------------------------------------
if __name__ == "__main__":
    B, T, C, n_head = 2, 8, 32, 4
    hd = C // n_head
    multiple_of = 32
    hidden = int(2 * (4 * C) / 3)
    hidden = multiple_of * ((hidden + multiple_of - 1) // multiple_of)  # -> 96
    eps = 1e-6

    key = jax.random.PRNGKey(0)
    ks = jax.random.split(key, 10)
    params = {
        'ln1_w':  1.0 + 0.1 * jax.random.normal(ks[8], (1, C), jnp.float32),
        'w_attn': 0.02 * jax.random.normal(ks[0], (C, 3 * C), jnp.float32),
        'b_attn': 0.02 * jax.random.normal(ks[1], (1, 3 * C), jnp.float32),
        'w_proj': 0.02 * jax.random.normal(ks[2], (C, C), jnp.float32),
        'b_proj': 0.02 * jax.random.normal(ks[3], (1, C), jnp.float32),
        'ln2_w':  1.0 + 0.1 * jax.random.normal(ks[9], (1, C), jnp.float32),
        'w1':     0.02 * jax.random.normal(ks[4], (C, hidden), jnp.float32),
        'w2':     0.02 * jax.random.normal(ks[5], (C, hidden), jnp.float32),
        'wc':     0.02 * jax.random.normal(ks[6], (hidden, C), jnp.float32),
    }
    x = jax.random.normal(ks[7], (B, T, C), jnp.float32)

    # One-time prep: bf16 weights, rotate-half Q/K permutation, scale fold,
    # RoPE tables and causal bias.
    prepared = prepare_params(params, n_head=n_head)
    cos_dup, sin_signed = build_rope_tables(T, hd)
    causal_bias = build_causal_bias(T)

    out = llama_block(x, prepared, cos_dup, sin_signed, causal_bias,
                      n_head=n_head, eps=eps)
    out = jax.block_until_ready(out)

    # Reference uses the original (unpermuted, f32) params and (T, hd/2) cos/sin,
    # exactly mirroring the PyTorch module.
    inv_freq = 1.0 / (10000.0 ** (jnp.arange(0, hd, 2, dtype=jnp.float32) / hd))
    ang = jnp.arange(T, dtype=jnp.float32)[:, None] * inv_freq[None, :]
    ref = reference_block(x, params, jnp.cos(ang), jnp.sin(ang),
                          n_head=n_head, eps=eps)
    assert out.shape == (B, T, C)
    err = float(jnp.max(jnp.abs(out - ref)))
    # kernel uses bf16 MXU operands + approx reciprocal; reference is all-f32
    assert err < 2e-2, err

    print("KERNEL_OK")
</pallas_src>

<mosaic_0001>
module attributes {stable_mosaic.version = 11 : i64} {
  func.func @llama_block_kernel(%arg0: i32, %arg1: memref<1x8x32xf32, #tpu.memory_space<vmem>>, %arg2: memref<1x32xf32, #tpu.memory_space<vmem>>, %arg3: memref<32x96xbf16, #tpu.memory_space<vmem>>, %arg4: memref<1x96xf32, #tpu.memory_space<vmem>>, %arg5: memref<32x32xbf16, #tpu.memory_space<vmem>>, %arg6: memref<1x32xf32, #tpu.memory_space<vmem>>, %arg7: memref<1x32xf32, #tpu.memory_space<vmem>>, %arg8: memref<32x96xbf16, #tpu.memory_space<vmem>>, %arg9: memref<32x96xbf16, #tpu.memory_space<vmem>>, %arg10: memref<96x32xbf16, #tpu.memory_space<vmem>>, %arg11: memref<8x8xf32, #tpu.memory_space<vmem>>, %arg12: memref<8x8xf32, #tpu.memory_space<vmem>>, %arg13: memref<8x8xf32, #tpu.memory_space<vmem>>, %arg14: memref<1x8x32xf32, #tpu.memory_space<vmem>>) attributes {dimension_semantics = [#tpu.dimension_semantics<parallel>], iteration_bounds = array<i64: 2>, scalar_prefetch = 0 : i64, scratch_operands = 0 : i64, tpu.core_type = #tpu.core_type<tc>, window_params = [{transform_indices = @transform_0, window_bounds = array<i64: 1, 8, 32>}, {pipeline_mode = #tpu.pipeline_mode<synchronous>, transform_indices = @transform_1, window_bounds = array<i64: 1, 32>}, {pipeline_mode = #tpu.pipeline_mode<synchronous>, transform_indices = @transform_2, window_bounds = array<i64: 32, 96>}, {pipeline_mode = #tpu.pipeline_mode<synchronous>, transform_indices = @transform_3, window_bounds = array<i64: 1, 96>}, {pipeline_mode = #tpu.pipeline_mode<synchronous>, transform_indices = @transform_4, window_bounds = array<i64: 32, 32>}, {pipeline_mode = #tpu.pipeline_mode<synchronous>, transform_indices = @transform_5, window_bounds = array<i64: 1, 32>}, {pipeline_mode = #tpu.pipeline_mode<synchronous>, transform_indices = @transform_6, window_bounds = array<i64: 1, 32>}, {pipeline_mode = #tpu.pipeline_mode<synchronous>, transform_indices = @transform_7, window_bounds = array<i64: 32, 96>}, {pipeline_mode = #tpu.pipeline_mode<synchronous>, transform_indices = @transform_8, window_bounds = array<i64: 32, 96>}, {pipeline_mode = #tpu.pipeline_mode<synchronous>, transform_indices = @transform_9, window_bounds = array<i64: 96, 32>}, {pipeline_mode = #tpu.pipeline_mode<synchronous>, transform_indices = @transform_10, window_bounds = array<i64: 8, 8>}, {pipeline_mode = #tpu.pipeline_mode<synchronous>, transform_indices = @transform_11, window_bounds = array<i64: 8, 8>}, {pipeline_mode = #tpu.pipeline_mode<synchronous>, transform_indices = @transform_12, window_bounds = array<i64: 8, 8>}, {transform_indices = @transform_13, window_bounds = array<i64: 1, 8, 32>}]} {
    %c0 = arith.constant 0 : index
    %c0_0 = arith.constant 0 : index
    %c0_1 = arith.constant 0 : index
    %0 = vector.load %arg1[%c0, %c0_0, %c0_1] : memref<1x8x32xf32, #tpu.memory_space<vmem>>, vector<1x8x32xf32>
    %1 = vector.shape_cast %0 : vector<1x8x32xf32> to vector<8x32xf32>
    %2 = arith.mulf %1, %1 : vector<8x32xf32>
    %cst = arith.constant dense<0.000000e+00> : vector<8xf32>
    %3 = vector.multi_reduction <add>, %2, %cst [1] : vector<8x32xf32> to vector<8xf32>
    %4 = vector.shape_cast %3 : vector<8xf32> to vector<8x1xf32>
    %cst_2 = arith.constant 3.200000e+01 : f32
    %5 = vector.broadcast %cst_2 : f32 to vector<8x1xf32>
    %6 = arith.divf %4, %5 : vector<8x1xf32>
    %cst_3 = arith.constant 9.99999997E-7 : f32
    %7 = vector.broadcast %cst_3 : f32 to vector<8x1xf32>
    %8 = arith.addf %6, %7 : vector<8x1xf32>
    %9 = math.rsqrt %8 : vector<8x1xf32>
    %10 = vector.broadcast %9 : vector<8x1xf32> to vector<8x32xf32>
    %11 = arith.mulf %1, %10 : vector<8x32xf32>
    %c0_4 = arith.constant 0 : index
    %c0_5 = arith.constant 0 : index
    %12 = vector.load %arg2[%c0_4, %c0_5] : memref<1x32xf32, #tpu.memory_space<vmem>>, vector<1x32xf32>
    %13 = vector.broadcast %12 : vector<1x32xf32> to vector<8x32xf32>
    %14 = arith.mulf %11, %13 : vector<8x32xf32>
    %15 = arith.truncf %14 : vector<8x32xf32> to vector<8x32xbf16>
    %c0_6 = arith.constant 0 : index
    %c0_7 = arith.constant 0 : index
    %16 = vector.load %arg3[%c0_6, %c0_7] : memref<32x96xbf16, #tpu.memory_space<vmem>>, vector<32x96xbf16>
    %cst_8 = arith.constant dense<0.000000e+00> : vector<8x96xf32>
    %17 = tpu.matmul %15, %16, %cst_8 {dimension_numbers = #tpu.dot_dimension_numbers<[1], [0], [0], [1], [0, 0, 1, 1], [], []>} : vector<8x32xbf16>, vector<32x96xbf16>, vector<8x96xf32> -> vector<8x96xf32>
    %c0_9 = arith.constant 0 : index
    %c0_10 = arith.constant 0 : index
    %18 = vector.load %arg4[%c0_9, %c0_10] : memref<1x96xf32, #tpu.memory_space<vmem>>, vector<1x96xf32>
    %19 = vector.broadcast %18 : vector<1x96xf32> to vector<8x96xf32>
    %20 = arith.addf %17, %19 : vector<8x96xf32>
    %21 = vector.extract_strided_slice %20 {offsets = [0, 0], sizes = [8, 32], strides = [1, 1]} : vector<8x96xf32> to vector<8x32xf32>
    %22 = vector.shape_cast %21 : vector<8x32xf32> to vector<8x4x8xf32>
    %23 = vector.extract_strided_slice %20 {offsets = [0, 32], sizes = [8, 32], strides = [1, 1]} : vector<8x96xf32> to vector<8x32xf32>
    %24 = vector.shape_cast %23 : vector<8x32xf32> to vector<8x4x8xf32>
    %25 = vector.extract_strided_slice %20 {offsets = [0, 64], sizes = [8, 32], strides = [1, 1]} : vector<8x96xf32> to vector<8x32xf32>
    %26 = vector.shape_cast %25 : vector<8x32xf32> to vector<8x4x8xf32>
    %c0_11 = arith.constant 0 : index
    %c0_12 = arith.constant 0 : index
    %27 = vector.load %arg11[%c0_11, %c0_12] : memref<8x8xf32, #tpu.memory_space<vmem>>, vector<8x8xf32>
    %28 = vector.shape_cast %27 : vector<8x8xf32> to vector<8x1x8xf32>
    %c0_13 = arith.constant 0 : index
    %c0_14 = arith.constant 0 : index
    %29 = vector.load %arg12[%c0_13, %c0_14] : memref<8x8xf32, #tpu.memory_space<vmem>>, vector<8x8xf32>
    %30 = vector.shape_cast %29 : vector<8x8xf32> to vector<8x1x8xf32>
    %31 = vector.extract_strided_slice %22 {offsets = [0, 0, 4], sizes = [8, 4, 4], strides = [1, 1, 1]} : vector<8x4x8xf32> to vector<8x4x4xf32>
    %32 = vector.extract_strided_slice %22 {offsets = [0, 0, 0], sizes = [8, 4, 4], strides = [1, 1, 1]} : vector<8x4x8xf32> to vector<8x4x4xf32>
    %33 = tpu.concatenate %31, %32 in 2 : vector<8x4x4xf32>, vector<8x4x4xf32> -> vector<8x4x8xf32>
    %34 = vector.broadcast %28 : vector<8x1x8xf32> to vector<8x4x8xf32>
    %35 = arith.mulf %22, %34 : vector<8x4x8xf32>
    %36 = vector.broadcast %30 : vector<8x1x8xf32> to vector<8x4x8xf32>
    %37 = arith.mulf %33, %36 : vector<8x4x8xf32>
    %38 = arith.addf %35, %37 : vector<8x4x8xf32>
    %39 = vector.extract_strided_slice %24 {offsets = [0, 0, 4], sizes = [8, 4, 4], strides = [1, 1, 1]} : vector<8x4x8xf32> to vector<8x4x4xf32>
    %40 = vector.extract_strided_slice %24 {offsets = [0, 0, 0], sizes = [8, 4, 4], strides = [1, 1, 1]} : vector<8x4x8xf32> to vector<8x4x4xf32>
    %41 = tpu.concatenate %39, %40 in 2 : vector<8x4x4xf32>, vector<8x4x4xf32> -> vector<8x4x8xf32>
    %42 = vector.broadcast %28 : vector<8x1x8xf32> to vector<8x4x8xf32>
    %43 = arith.mulf %24, %42 : vector<8x4x8xf32>
    %44 = vector.broadcast %30 : vector<8x1x8xf32> to vector<8x4x8xf32>
    %45 = arith.mulf %41, %44 : vector<8x4x8xf32>
    %46 = arith.addf %43, %45 : vector<8x4x8xf32>
    %47 = tpu.transpose %38, [1, 0, 2] : vector<8x4x8xf32> -> vector<4x8x8xf32>
    %48 = arith.truncf %47 : vector<4x8x8xf32> to vector<4x8x8xbf16>
    %49 = tpu.transpose %46, [1, 0, 2] : vector<8x4x8xf32> -> vector<4x8x8xf32>
    %50 = arith.truncf %49 : vector<4x8x8xf32> to vector<4x8x8xbf16>
    %51 = tpu.transpose %26, [1, 0, 2] : vector<8x4x8xf32> -> vector<4x8x8xf32>
    %52 = arith.truncf %51 : vector<4x8x8xf32> to vector<4x8x8xbf16>
    "tpu.trace_start"() <{level = 10 : i32, message = "htd,hsd->hts"}> : () -> ()
    %cst_15 = arith.constant dense<0.000000e+00> : vector<4x8x8xf32>
    %53 = tpu.matmul %48, %50, %cst_15 {dimension_numbers = #tpu.dot_dimension_numbers<[2], [2], [1], [1], [0, 0, 0, 1, 1, 1], [0], [0]>} : vector<4x8x8xbf16>, vector<4x8x8xbf16>, vector<4x8x8xf32> -> vector<4x8x8xf32>
    "tpu.trace_stop"() : () -> ()
    %c0_16 = arith.constant 0 : index
    %c0_17 = arith.constant 0 : index
    %54 = vector.load %arg13[%c0_16, %c0_17] : memref<8x8xf32, #tpu.memory_space<vmem>>, vector<8x8xf32>
    %55 = vector.shape_cast %54 : vector<8x8xf32> to vector<1x8x8xf32>
    %56 = vector.broadcast %55 : vector<1x8x8xf32> to vector<4x8x8xf32>
    %57 = arith.addf %53, %56 : vector<4x8x8xf32>
    %cst_18 = arith.constant dense<0xFF800000> : vector<4x8xf32>
    %58 = vector.multi_reduction <maximumf>, %57, %cst_18 [2] : vector<4x8x8xf32> to vector<4x8xf32>
    %59 = vector.shape_cast %58 : vector<4x8xf32> to vector<4x8x1xf32>
    %60 = vector.broadcast %59 : vector<4x8x1xf32> to vector<4x8x8xf32>
    %61 = arith.subf %57, %60 : vector<4x8x8xf32>
    %62 = math.exp %61 : vector<4x8x8xf32>
    %cst_19 = arith.constant dense<0.000000e+00> : vector<4x8xf32>
    %63 = vector.multi_reduction <add>, %62, %cst_19 [2] : vector<4x8x8xf32> to vector<4x8xf32>
    %64 = vector.shape_cast %63 : vector<4x8xf32> to vector<4x8x1xf32>
    %65 = arith.truncf %62 : vector<4x8x8xf32> to vector<4x8x8xbf16>
    "tpu.trace_start"() <{level = 10 : i32, message = "hts,hsd->htd"}> : () -> ()
    %cst_20 = arith.constant dense<0.000000e+00> : vector<4x8x8xf32>
    %66 = tpu.matmul %65, %52, %cst_20 {dimension_numbers = #tpu.dot_dimension_numbers<[2], [1], [1], [2], [0, 0, 0, 1, 1, 2], [0], [0]>} : vector<4x8x8xbf16>, vector<4x8x8xbf16>, vector<4x8x8xf32> -> vector<4x8x8xf32>
    "tpu.trace_stop"() : () -> ()
    %67 = tpu.reciprocal %64 {approx = true} : vector<4x8x1xf32> -> vector<4x8x1xf32>
    %68 = vector.broadcast %67 : vector<4x8x1xf32> to vector<4x8x8xf32>
    %69 = arith.mulf %66, %68 : vector<4x8x8xf32>
    %70 = tpu.transpose %69, [1, 0, 2] : vector<4x8x8xf32> -> vector<8x4x8xf32>
    %71 = vector.shape_cast %70 : vector<8x4x8xf32> to vector<8x32xf32>
    %72 = arith.truncf %71 : vector<8x32xf32> to vector<8x32xbf16>
    %c0_21 = arith.constant 0 : index
    %c0_22 = arith.constant 0 : index
    %73 = vector.load %arg5[%c0_21, %c0_22] : memref<32x32xbf16, #tpu.memory_space<vmem>>, vector<32x32xbf16>
    %cst_23 = arith.constant dense<0.000000e+00> : vector<8x32xf32>
    %74 = tpu.matmul %72, %73, %cst_23 {dimension_numbers = #tpu.dot_dimension_numbers<[1], [0], [0], [1], [0, 0, 1, 1], [], []>} : vector<8x32xbf16>, vector<32x32xbf16>, vector<8x32xf32> -> vector<8x32xf32>
    %c0_24 = arith.constant 0 : index
    %c0_25 = arith.constant 0 : index
    %75 = vector.load %arg6[%c0_24, %c0_25] : memref<1x32xf32, #tpu.memory_space<vmem>>, vector<1x32xf32>
    %76 = vector.broadcast %75 : vector<1x32xf32> to vector<8x32xf32>
    %77 = arith.addf %74, %76 : vector<8x32xf32>
    %78 = arith.addf %1, %77 : vector<8x32xf32>
    %79 = arith.mulf %78, %78 : vector<8x32xf32>
    %cst_26 = arith.constant dense<0.000000e+00> : vector<8xf32>
    %80 = vector.multi_reduction <add>, %79, %cst_26 [1] : vector<8x32xf32> to vector<8xf32>
    %81 = vector.shape_cast %80 : vector<8xf32> to vector<8x1xf32>
    %cst_27 = arith.constant 3.200000e+01 : f32
    %82 = vector.broadcast %cst_27 : f32 to vector<8x1xf32>
    %83 = arith.divf %81, %82 : vector<8x1xf32>
    %cst_28 = arith.constant 9.99999997E-7 : f32
    %84 = vector.broadcast %cst_28 : f32 to vector<8x1xf32>
    %85 = arith.addf %83, %84 : vector<8x1xf32>
    %86 = math.rsqrt %85 : vector<8x1xf32>
    %87 = vector.broadcast %86 : vector<8x1xf32> to vector<8x32xf32>
    %88 = arith.mulf %78, %87 : vector<8x32xf32>
    %c0_29 = arith.constant 0 : index
    %c0_30 = arith.constant 0 : index
    %89 = vector.load %arg7[%c0_29, %c0_30] : memref<1x32xf32, #tpu.memory_space<vmem>>, vector<1x32xf32>
    %90 = vector.broadcast %89 : vector<1x32xf32> to vector<8x32xf32>
    %91 = arith.mulf %88, %90 : vector<8x32xf32>
    %92 = arith.truncf %91 : vector<8x32xf32> to vector<8x32xbf16>
    %c0_31 = arith.constant 0 : index
    %c0_32 = arith.constant 0 : index
    %93 = vector.load %arg8[%c0_31, %c0_32] : memref<32x96xbf16, #tpu.memory_space<vmem>>, vector<32x96xbf16>
    %cst_33 = arith.constant dense<0.000000e+00> : vector<8x96xf32>
    %94 = tpu.matmul %92, %93, %cst_33 {dimension_numbers = #tpu.dot_dimension_numbers<[1], [0], [0], [1], [0, 0, 1, 1], [], []>} : vector<8x32xbf16>, vector<32x96xbf16>, vector<8x96xf32> -> vector<8x96xf32>
    %c0_34 = arith.constant 0 : index
    %c0_35 = arith.constant 0 : index
    %95 = vector.load %arg9[%c0_34, %c0_35] : memref<32x96xbf16, #tpu.memory_space<vmem>>, vector<32x96xbf16>
    %cst_36 = arith.constant dense<0.000000e+00> : vector<8x96xf32>
    %96 = tpu.matmul %92, %95, %cst_36 {dimension_numbers = #tpu.dot_dimension_numbers<[1], [0], [0], [1], [0, 0, 1, 1], [], []>} : vector<8x32xbf16>, vector<32x96xbf16>, vector<8x96xf32> -> vector<8x96xf32>
    %97 = arith.negf %94 : vector<8x96xf32>
    %98 = math.exp %97 : vector<8x96xf32>
    %cst_37 = arith.constant 1.000000e+00 : f32
    %99 = vector.broadcast %cst_37 : f32 to vector<8x96xf32>
    %100 = arith.addf %99, %98 : vector<8x96xf32>
    %101 = arith.divf %99, %100 : vector<8x96xf32>
    %102 = arith.mulf %94, %101 : vector<8x96xf32>
    %103 = arith.mulf %102, %96 : vector<8x96xf32>
    %104 = arith.truncf %103 : vector<8x96xf32> to vector<8x96xbf16>
    %c0_38 = arith.constant 0 : index
    %c0_39 = arith.constant 0 : index
    %105 = vector.load %arg10[%c0_38, %c0_39] : memref<96x32xbf16, #tpu.memory_space<vmem>>, vector<96x32xbf16>
    %cst_40 = arith.constant dense<0.000000e+00> : vector<8x32xf32>
    %106 = tpu.matmul %104, %105, %cst_40 {dimension_numbers = #tpu.dot_dimension_numbers<[1], [0], [0], [1], [0, 0, 1, 1], [], []>} : vector<8x96xbf16>, vector<96x32xbf16>, vector<8x32xf32> -> vector<8x32xf32>
    %107 = arith.addf %78, %106 : vector<8x32xf32>
    %c0_41 = arith.constant 0 : index
    %c0_42 = arith.constant 0 : index
    %c0_43 = arith.constant 0 : index
    %108 = vector.load %arg14[%c0_41, %c0_42, %c0_43] : memref<1x8x32xf32, #tpu.memory_space<vmem>>, vector<1x8x32xf32>
    %109 = vector.shape_cast %108 : vector<1x8x32xf32> to vector<8x32xf32>
    %110 = vector.shape_cast %107 : vector<8x32xf32> to vector<1x8x32xf32>
    tpu.vector_store %arg14[%c0_41, %c0_42, %c0_43], %110 {strides = array<i32>} : memref<1x8x32xf32, #tpu.memory_space<vmem>>, vector<1x8x32xf32>,
    return
  }
  func.func @transform_0(%arg0: i32) -> (i32, i32, i32) {
    %c0_i32 = arith.constant 0 : i32
    %c0_i32_0 = arith.constant 0 : i32
    %c0_i32_1 = arith.constant 0 : i32
    return %arg0, %c0_i32, %c0_i32_0 : i32, i32, i32
  }
  func.func @transform_1(%arg0: i32) -> (i32, i32) {
    %c0_i32 = arith.constant 0 : i32
    %c0_i32_0 = arith.constant 0 : i32
    %c0_i32_1 = arith.constant 0 : i32
    return %c0_i32, %c0_i32_0 : i32, i32
  }
  func.func @transform_2(%arg0: i32) -> (i32, i32) {
    %c0_i32 = arith.constant 0 : i32
    %c0_i32_0 = arith.constant 0 : i32
    %c0_i32_1 = arith.constant 0 : i32
    return %c0_i32, %c0_i32_0 : i32, i32
  }
  func.func @transform_3(%arg0: i32) -> (i32, i32) {
    %c0_i32 = arith.constant 0 : i32
    %c0_i32_0 = arith.constant 0 : i32
    %c0_i32_1 = arith.constant 0 : i32
    return %c0_i32, %c0_i32_0 : i32, i32
  }
  func.func @transform_4(%arg0: i32) -> (i32, i32) {
    %c0_i32 = arith.constant 0 : i32
    %c0_i32_0 = arith.constant 0 : i32
    %c0_i32_1 = arith.constant 0 : i32
    return %c0_i32, %c0_i32_0 : i32, i32
  }
  func.func @transform_5(%arg0: i32) -> (i32, i32) {
    %c0_i32 = arith.constant 0 : i32
    %c0_i32_0 = arith.constant 0 : i32
    %c0_i32_1 = arith.constant 0 : i32
    return %c0_i32, %c0_i32_0 : i32, i32
  }
  func.func @transform_6(%arg0: i32) -> (i32, i32) {
    %c0_i32 = arith.constant 0 : i32
    %c0_i32_0 = arith.constant 0 : i32
    %c0_i32_1 = arith.constant 0 : i32
    return %c0_i32, %c0_i32_0 : i32, i32
  }
  func.func @transform_7(%arg0: i32) -> (i32, i32) {
    %c0_i32 = arith.constant 0 : i32
    %c0_i32_0 = arith.constant 0 : i32
    %c0_i32_1 = arith.constant 0 : i32
    return %c0_i32, %c0_i32_0 : i32, i32
  }
  func.func @transform_8(%arg0: i32) -> (i32, i32) {
    %c0_i32 = arith.constant 0 : i32
    %c0_i32_0 = arith.constant 0 : i32
    %c0_i32_1 = arith.constant 0 : i32
    return %c0_i32, %c0_i32_0 : i32, i32
  }
  func.func @transform_9(%arg0: i32) -> (i32, i32) {
    %c0_i32 = arith.constant 0 : i32
    %c0_i32_0 = arith.constant 0 : i32
    %c0_i32_1 = arith.constant 0 : i32
    return %c0_i32, %c0_i32_0 : i32, i32
  }
  func.func @transform_10(%arg0: i32) -> (i32, i32) {
    %c0_i32 = arith.constant 0 : i32
    %c0_i32_0 = arith.constant 0 : i32
    %c0_i32_1 = arith.constant 0 : i32
    return %c0_i32, %c0_i32_0 : i32, i32
  }
  func.func @transform_11(%arg0: i32) -> (i32, i32) {
    %c0_i32 = arith.constant 0 : i32
    %c0_i32_0 = arith.constant 0 : i32
    %c0_i32_1 = arith.constant 0 : i32
    return %c0_i32, %c0_i32_0 : i32, i32
  }
  func.func @transform_12(%arg0: i32) -> (i32, i32) {
    %c0_i32 = arith.constant 0 : i32
    %c0_i32_0 = arith.constant 0 : i32
    %c0_i32_1 = arith.constant 0 : i32
    return %c0_i32, %c0_i32_0 : i32, i32
  }
  func.func @transform_13(%arg0: i32) -> (i32, i32, i32) {
    %c0_i32 = arith.constant 0 : i32
    %c0_i32_0 = arith.constant 0 : i32
    %c0_i32_1 = arith.constant 0 : i32
    return %arg0, %c0_i32, %c0_i32_0 : i32, i32, i32
  }
}

</mosaic_0001>

<llo_original>
// kernel: tpu_custom_call.1
$region0: #{tpu_custom_call.1}
  #allocation0 [shape = 'u32[]', space=smem, size = 0x4, offset = 0x4, fixed_abs, tag = 'smem constant byte address 0x4 - core index']
  #allocation1 [shape = 'u32[144,128]{1,0:T(1,128)}', space=vmem, size = 0x12000, scoped, tag = 'internal scratch']
  %s0 = inlined_call_operand.vmem [shape: f32[2,8,32], index: 0, kind: input, shape index: {}]
  %s1 = inlined_call_operand.hbm [shape: f32[1,32], index: 1, kind: input, shape index: {}]
  %s2 = inlined_call_operand.vmem [shape: bf16[32,96], index: 2, kind: input, shape index: {}]
  %s3 = inlined_call_operand.hbm [shape: f32[1,96], index: 3, kind: input, shape index: {}]
  %s4 = inlined_call_operand.vmem [shape: bf16[32,32], index: 4, kind: input, shape index: {}]
  %s5 = inlined_call_operand.hbm [shape: f32[1,32], index: 5, kind: input, shape index: {}]
  %s6 = inlined_call_operand.hbm [shape: f32[1,32], index: 6, kind: input, shape index: {}]
  %s7 = inlined_call_operand.vmem [shape: bf16[32,96], index: 7, kind: input, shape index: {}]
  %s8 = inlined_call_operand.hbm [shape: bf16[32,96], index: 8, kind: input, shape index: {}]
  %s9 = inlined_call_operand.vmem [shape: bf16[96,32], index: 9, kind: input, shape index: {}]
  %s10 = inlined_call_operand.hbm [shape: f32[8,8], index: 10, kind: input, shape index: {}]
  %s11 = inlined_call_operand.hbm [shape: f32[8,8], index: 11, kind: input, shape index: {}]
  %s12 = inlined_call_operand.hbm [shape: f32[8,8], index: 12, kind: input, shape index: {}]
  %s13 = inlined_call_operand.hbm [shape: f32[2,8,32], index: 13, kind: output, shape index: {}]
  %s14 = sld [smem:[#allocation0]]
  $region117: #{tpu_custom_call.1} parent=0
    _
  %s16 = ssub.s32 1, %s14
  %s17 = scalar_select 0, %s16, %s14
  $region1: #{tpu_custom_call.1} parent=0
    #allocation2 [shape = 'u8[512]{0}', space=vmem, size = 0x400, scoped, tag = 'input window, operand 1, single buffered']
    #allocation3 [shape = 's32[2]{0}', space=sflag, size = 0x8, scoped, tag = 'scoped memory for tpu_custom_call.1']
    #allocation4 [shape = 's32[2]{0}', space=sflag, size = 0x8, scoped, tag = 'scoped memory for tpu_custom_call.1']
    #allocation5 [shape = 'u8[512]{0}', space=vmem, size = 0x400, scoped, tag = 'input window, operand 3, single buffered']
    #allocation6 [shape = 's32[1]{0}', space=sflag, size = 0x4, scoped, tag = 'scoped memory for tpu_custom_call.1']
    #allocation7 [shape = 'u8[512]{0}', space=vmem, size = 0x400, scoped, tag = 'input window, operand 5, single buffered']
    #allocation8 [shape = 'u8[512]{0}', space=vmem, size = 0x400, scoped, tag = 'input window, operand 6, single buffered']
    #allocation9 [shape = 's32[1]{0}', space=sflag, size = 0x4, scoped, tag = 'scoped memory for tpu_custom_call.1']
    #allocation10 [shape = 'u8[8192]{0}', space=vmem, size = 0x2000, scoped, tag = 'input window, operand 8, single buffered']
    #allocation11 [shape = 'u8[4096]{0}', space=vmem, size = 0x1000, scoped, tag = 'input window, operand 10, single buffered']
    #allocation12 [shape = 's32[1]{0}', space=sflag, size = 0x4, scoped, tag = 'scoped memory for tpu_custom_call.1']
    #allocation13 [shape = 'u8[4096]{0}', space=vmem, size = 0x1000, scoped, tag = 'input window, operand 11, single buffered']
    #allocation14 [shape = 'u8[4096]{0}', space=vmem, size = 0x1000, scoped, tag = 'input window, operand 12, single buffered']
    #allocation15 [shape = 's32[1]{0}', space=sflag, size = 0x4, scoped, tag = 'scoped memory for tpu_custom_call.1']
    #allocation16 [shape = 'u8[8192]{0}', space=vmem, size = 0x2000, scoped, tag = 'output window, operand 0']
    %18 = vsyncpa [#allocation3], 0
    %19 = vsyncpa [#allocation6], 0
    %20 = vsyncpa [#allocation9], 0
    %21 = vsyncpa [#allocation12], 0
    %22 = vsyncpa [#allocation15], 0
    %23 = vsyncpa [#allocation4], 0
    %s24 = scalar_lea.sflag [#allocation4], 1
    %25 = vsyncpa %s24, 0
    loop: start=0, step=1, limit=4
    $region2: #{tpu_custom_call.1} parent=1 // loop_pre_header
      _
    $region3: #{tpu_custom_call.1} parent=1 // loop_header
      %s27 = sphi 0, %s31
      %p28 = scmp.ge.s32.totalorder %s27, 4
      %s37 = sphi 0, %s39
      %s40 = sphi 0, %s37
      %s41 = sphi 0, %s40
      %s57 = sphi 0, %s41
      %s61 = sphi 0, %s61
      %s63 = sphi 0, %s61
      %s64 = sphi 0, %s63
      %s78 = sphi 0, %s64
      %s82 = sphi 0, %s82
      %s84 = sphi 0, %s82
      %s85 = sphi 0, %s84
      %s99 = sphi 0, %s85
      %s103 = sphi 0, %s103
      %s105 = sphi 0, %s103
      %s106 = sphi 0, %s105
      %s120 = sphi 0, %s106
      %s124 = sphi 0, %s124
      %s126 = sphi 0, %s124
      %s127 = sphi 0, %s126
      %s141 = sphi 0, %s127
      %s145 = sphi 0, %s145
      %s147 = sphi 0, %s145
      %s148 = sphi 0, %s147
      %s162 = sphi 0, %s148
      %s166 = sphi 0, %s166
      %s168 = sphi 0, %s166
      %s169 = sphi 0, %s168
      %s183 = sphi 0, %s169
      %s187 = sphi 0, %s187
      %s189 = sphi 0, %s187
      %s190 = sphi 0, %s189
      %s204 = sphi 0, %s190
      %s208 = sphi 0, %s208
      %s210 = sphi 0, %s208
      %s211 = sphi 0, %s210
      %s225 = sphi 0, %s211
      %s229 = sphi 0, %s229
      %s231 = sphi 0, %s229
      %s232 = sphi 0, %s231
      %s246 = sphi 0, %s232
      %s250 = sphi 0, %s250
      %s252 = sphi 0, %s250
      %s253 = sphi 0, %s252
      %s267 = sphi 0, %s253
      %s271 = sphi 0, %s271
      %s273 = sphi 0, %s271
      %s274 = sphi 0, %s273
      %s288 = sphi 0, %s274
      %s292 = sphi 0, %s292
      %s294 = sphi 0, %s292
      %s295 = sphi 0, %s294
      %s309 = sphi 0, %s295
      %s315 = sphi 0, %s317
      %s318 = sphi 0, %s315
      %s319 = sphi 0, %s318
      %s335 = sphi 0, %s319
    $region4: #{tpu_custom_call.1} parent=1 // loop_header_branch
      %30 = sbr.rel (%p28) target = $region8
    $region5: #{tpu_custom_call.1} parent=1 // loop_body
      %s32 = ssub.s32 %s27, 1
      %s33 = ssub.s32 %s27, 2
      %s34 = sadd.s32 %s27, 1
      %s35 = ssub.s32 %s27, %s34
      %p36 = scmp.eq.s32.totalorder %s35, 0
      %s38 = sadd.s32 %s37, 1
      %s39 = scalar_select %p36, %s37, %s38
      %p42 = pneg %p36
      %p43 = scmp.eq.s32.totalorder %s27, 1
      %p44 = por %p42, %p43
      %p45 = scmp.ne.s32.totalorder %s37, %s40
      %p46 = scmp.eq.s32.totalorder %s27, 0
      %p47 = por %p45, %p46
      %p48 = scmp.ne.s32.totalorder %s37, %s40
      %p49 = scmp.eq.s32.totalorder %s32, 1
      %p50 = por %p48, %p49
      %p51 = scmp.ne.s32.totalorder %s40, %s41
      %p52 = scmp.eq.s32.totalorder %s32, 0
      %p53 = por %p51, %p52
      %p54 = scmp.ne.s32.totalorder %s40, %s41
      %p55 = scmp.eq.s32.totalorder %s33, 1
      %p56 = por %p54, %p55
      %p58 = scmp.ne.s32.totalorder %s41, %s57
      %p59 = scmp.eq.s32.totalorder %s33, 0
      %p60 = por %p58, %p59
      %s62 = sadd.s32 %s61, 1
      %p65 = scmp.eq.s32.totalorder %s27, 1
      %p66 = scmp.ne.s32.totalorder %s61, %s63
      %p67 = scmp.eq.s32.totalorder %s27, 0
      %p68 = por %p66, %p67
      %p69 = scmp.ne.s32.totalorder %s61, %s63
      %p70 = scmp.eq.s32.totalorder %s32, 1
      %p71 = por %p69, %p70
      %p72 = scmp.ne.s32.totalorder %s63, %s64
      %p73 = scmp.eq.s32.totalorder %s32, 0
      %p74 = por %p72, %p73
      %p75 = scmp.ne.s32.totalorder %s63, %s64
      %p76 = scmp.eq.s32.totalorder %s33, 1
      %p77 = por %p75, %p76
      %p79 = scmp.ne.s32.totalorder %s64, %s78
      %p80 = scmp.eq.s32.totalorder %s33, 0
      %p81 = por %p79, %p80
      %s83 = sadd.s32 %s82, 1
      %p86 = scmp.eq.s32.totalorder %s27, 1
      %p87 = scmp.ne.s32.totalorder %s82, %s84
      %p88 = scmp.eq.s32.totalorder %s27, 0
      %p89 = por %p87, %p88
      %p90 = scmp.ne.s32.totalorder %s82, %s84
      %p91 = scmp.eq.s32.totalorder %s32, 1
      %p92 = por %p90, %p91
      %p93 = scmp.ne.s32.totalorder %s84, %s85
      %p94 = scmp.eq.s32.totalorder %s32, 0
      %p95 = por %p93, %p94
      %p96 = scmp.ne.s32.totalorder %s84, %s85
      %p97 = scmp.eq.s32.totalorder %s33, 1
      %p98 = por %p96, %p97
      %p100 = scmp.ne.s32.totalorder %s85, %s99
      %p101 = scmp.eq.s32.totalorder %s33, 0
      %p102 = por %p100, %p101
      %s104 = sadd.s32 %s103, 1
      %p107 = scmp.eq.s32.totalorder %s27, 1
      %p108 = scmp.ne.s32.totalorder %s103, %s105
      %p109 = scmp.eq.s32.totalorder %s27, 0
      %p110 = por %p108, %p109
      %p111 = scmp.ne.s32.totalorder %s103, %s105
      %p112 = scmp.eq.s32.totalorder %s32, 1
      %p113 = por %p111, %p112
      %p114 = scmp.ne.s32.totalorder %s105, %s106
      %p115 = scmp.eq.s32.totalorder %s32, 0
      %p116 = por %p114, %p115
      %p117 = scmp.ne.s32.totalorder %s105, %s106
      %p118 = scmp.eq.s32.totalorder %s33, 1
      %p119 = por %p117, %p118
      %p121 = scmp.ne.s32.totalorder %s106, %s120
      %p122 = scmp.eq.s32.totalorder %s33, 0
      %p123 = por %p121, %p122
      %s125 = sadd.s32 %s124, 1
      %p128 = scmp.eq.s32.totalorder %s27, 1
      %p129 = scmp.ne.s32.totalorder %s124, %s126
      %p130 = scmp.eq.s32.totalorder %s27, 0
      %p131 = por %p129, %p130
      %p132 = scmp.ne.s32.totalorder %s124, %s126
      %p133 = scmp.eq.s32.totalorder %s32, 1
      %p134 = por %p132, %p133
      %p135 = scmp.ne.s32.totalorder %s126, %s127
      %p136 = scmp.eq.s32.totalorder %s32, 0
      %p137 = por %p135, %p136
      %p138 = scmp.ne.s32.totalorder %s126, %s127
      %p139 = scmp.eq.s32.totalorder %s33, 1
      %p140 = por %p138, %p139
      %p142 = scmp.ne.s32.totalorder %s127, %s141
      %p143 = scmp.eq.s32.totalorder %s33, 0
      %p144 = por %p142, %p143
      %s146 = sadd.s32 %s145, 1
      %p149 = scmp.eq.s32.totalorder %s27, 1
      %p150 = scmp.ne.s32.totalorder %s145, %s147
      %p151 = scmp.eq.s32.totalorder %s27, 0
      %p152 = por %p150, %p151
      %p153 = scmp.ne.s32.totalorder %s145, %s147
      %p154 = scmp.eq.s32.totalorder %s32, 1
      %p155 = por %p153, %p154
      %p156 = scmp.ne.s32.totalorder %s147, %s148
      %p157 = scmp.eq.s32.totalorder %s32, 0
      %p158 = por %p156, %p157
      %p159 = scmp.ne.s32.totalorder %s147, %s148
      %p160 = scmp.eq.s32.totalorder %s33, 1
      %p161 = por %p159, %p160
      %p163 = scmp.ne.s32.totalorder %s148, %s162
      %p164 = scmp.eq.s32.totalorder %s33, 0
      %p165 = por %p163, %p164
      %s167 = sadd.s32 %s166, 1
      %p170 = scmp.eq.s32.totalorder %s27, 1
      %p171 = scmp.ne.s32.totalorder %s166, %s168
      %p172 = scmp.eq.s32.totalorder %s27, 0
      %p173 = por %p171, %p172
      %p174 = scmp.ne.s32.totalorder %s166, %s168
      %p175 = scmp.eq.s32.totalorder %s32, 1
      %p176 = por %p174, %p175
      %p177 = scmp.ne.s32.totalorder %s168, %s169
      %p178 = scmp.eq.s32.totalorder %s32, 0
      %p179 = por %p177, %p178
      %p180 = scmp.ne.s32.totalorder %s168, %s169
      %p181 = scmp.eq.s32.totalorder %s33, 1
      %p182 = por %p180, %p181
      %p184 = scmp.ne.s32.totalorder %s169, %s183
      %p185 = scmp.eq.s32.totalorder %s33, 0
      %p186 = por %p184, %p185
      %s188 = sadd.s32 %s187, 1
      %p191 = scmp.eq.s32.totalorder %s27, 1
      %p192 = scmp.ne.s32.totalorder %s187, %s189
      %p193 = scmp.eq.s32.totalorder %s27, 0
      %p194 = por %p192, %p193
      %p195 = scmp.ne.s32.totalorder %s187, %s189
      %p196 = scmp.eq.s32.totalorder %s32, 1
      %p197 = por %p195, %p196
      %p198 = scmp.ne.s32.totalorder %s189, %s190
      %p199 = scmp.eq.s32.totalorder %s32, 0
      %p200 = por %p198, %p199
      %p201 = scmp.ne.s32.totalorder %s189, %s190
      %p202 = scmp.eq.s32.totalorder %s33, 1
      %p203 = por %p201, %p202
      %p205 = scmp.ne.s32.totalorder %s190, %s204
      %p206 = scmp.eq.s32.totalorder %s33, 0
      %p207 = por %p205, %p206
      %s209 = sadd.s32 %s208, 1
      %p212 = scmp.eq.s32.totalorder %s27, 1
      %p213 = scmp.ne.s32.totalorder %s208, %s210
      %p214 = scmp.eq.s32.totalorder %s27, 0
      %p215 = por %p213, %p214
      %p216 = scmp.ne.s32.totalorder %s208, %s210
      %p217 = scmp.eq.s32.totalorder %s32, 1
      %p218 = por %p216, %p217
      %p219 = scmp.ne.s32.totalorder %s210, %s211
      %p220 = scmp.eq.s32.totalorder %s32, 0
      %p221 = por %p219, %p220
      %p222 = scmp.ne.s32.totalorder %s210, %s211
      %p223 = scmp.eq.s32.totalorder %s33, 1
      %p224 = por %p222, %p223
      %p226 = scmp.ne.s32.totalorder %s211, %s225
      %p227 = scmp.eq.s32.totalorder %s33, 0
      %p228 = por %p226, %p227
      %s230 = sadd.s32 %s229, 1
      %p233 = scmp.eq.s32.totalorder %s27, 1
      %p234 = scmp.ne.s32.totalorder %s229, %s231
      %p235 = scmp.eq.s32.totalorder %s27, 0
      %p236 = por %p234, %p235
      %p237 = scmp.ne.s32.totalorder %s229, %s231
      %p238 = scmp.eq.s32.totalorder %s32, 1
      %p239 = por %p237, %p238
      %p240 = scmp.ne.s32.totalorder %s231, %s232
      %p241 = scmp.eq.s32.totalorder %s32, 0
      %p242 = por %p240, %p241
      %p243 = scmp.ne.s32.totalorder %s231, %s232
      %p244 = scmp.eq.s32.totalorder %s33, 1
      %p245 = por %p243, %p244
      %p247 = scmp.ne.s32.totalorder %s232, %s246
      %p248 = scmp.eq.s32.totalorder %s33, 0
      %p249 = por %p247, %p248
      %s251 = sadd.s32 %s250, 1
      %p254 = scmp.eq.s32.totalorder %s27, 1
      %p255 = scmp.ne.s32.totalorder %s250, %s252
      %p256 = scmp.eq.s32.totalorder %s27, 0
      %p257 = por %p255, %p256
      %p258 = scmp.ne.s32.totalorder %s250, %s252
      %p259 = scmp.eq.s32.totalorder %s32, 1
      %p260 = por %p258, %p259
      %p261 = scmp.ne.s32.totalorder %s252, %s253
      %p262 = scmp.eq.s32.totalorder %s32, 0
      %p263 = por %p261, %p262
      %p264 = scmp.ne.s32.totalorder %s252, %s253
      %p265 = scmp.eq.s32.totalorder %s33, 1
      %p266 = por %p264, %p265
      %p268 = scmp.ne.s32.totalorder %s253, %s267
      %p269 = scmp.eq.s32.totalorder %s33, 0
      %p270 = por %p268, %p269
      %s272 = sadd.s32 %s271, 1
      %p275 = scmp.eq.s32.totalorder %s27, 1
      %p276 = scmp.ne.s32.totalorder %s271, %s273
      %p277 = scmp.eq.s32.totalorder %s27, 0
      %p278 = por %p276, %p277
      %p279 = scmp.ne.s32.totalorder %s271, %s273
      %p280 = scmp.eq.s32.totalorder %s32, 1
      %p281 = por %p279, %p280
      %p282 = scmp.ne.s32.totalorder %s273, %s274
      %p283 = scmp.eq.s32.totalorder %s32, 0
      %p284 = por %p282, %p283
      %p285 = scmp.ne.s32.totalorder %s273, %s274
      %p286 = scmp.eq.s32.totalorder %s33, 1
      %p287 = por %p285, %p286
      %p289 = scmp.ne.s32.totalorder %s274, %s288
      %p290 = scmp.eq.s32.totalorder %s33, 0
      %p291 = por %p289, %p290
      %s293 = sadd.s32 %s292, 1
      %p296 = scmp.eq.s32.totalorder %s27, 1
      %p297 = scmp.ne.s32.totalorder %s292, %s294
      %p298 = scmp.eq.s32.totalorder %s27, 0
      %p299 = por %p297, %p298
      %p300 = scmp.ne.s32.totalorder %s292, %s294
      %p301 = scmp.eq.s32.totalorder %s32, 1
      %p302 = por %p300, %p301
      %p303 = scmp.ne.s32.totalorder %s294, %s295
      %p304 = scmp.eq.s32.totalorder %s32, 0
      %p305 = por %p303, %p304
      %p306 = scmp.ne.s32.totalorder %s294, %s295
      %p307 = scmp.eq.s32.totalorder %s33, 1
      %p308 = por %p306, %p307
      %p310 = scmp.ne.s32.totalorder %s295, %s309
      %p311 = scmp.eq.s32.totalorder %s33, 0
      %p312 = por %p310, %p311
      %s313 = ssub.s32 %s27, %s34
      %p314 = scmp.eq.s32.totalorder %s313, 0
      %s316 = sadd.s32 %s315, 1
      %s317 = scalar_select %p314, %s315, %s316
      %p320 = pneg %p314
      %p321 = scmp.eq.s32.totalorder %s27, 1
      %p322 = por %p320, %p321
      %p323 = scmp.ne.s32.totalorder %s315, %s318
      %p324 = scmp.eq.s32.totalorder %s27, 0
      %p325 = por %p323, %p324
      %p326 = scmp.ne.s32.totalorder %s315, %s318
      %p327 = scmp.eq.s32.totalorder %s32, 1
      %p328 = por %p326, %p327
      %p329 = scmp.ne.s32.totalorder %s318, %s319
      %p330 = scmp.eq.s32.totalorder %s32, 0
      %p331 = por %p329, %p330
      %p332 = scmp.ne.s32.totalorder %s318, %s319
      %p333 = scmp.eq.s32.totalorder %s33, 1
      %p334 = por %p332, %p333
      %p336 = scmp.ne.s32.totalorder %s319, %s335
      %p337 = scmp.eq.s32.totalorder %s33, 0
      %p338 = por %p336, %p337
      %p339 = scmp.le.s32.totalorder 1, %s27
      %p340 = scmp.lt.s32.totalorder %s27, 3
      %p341 = pnand %p339, %p340
      %p342 = pneg %p341
      // Predicated region
      $region9: #{tpu_custom_call.1} parent=5 // pred_check
        _
      $region10: #{tpu_custom_call.1} parent=5 // pred_check_branch
        %344 = sbr.rel (%p341) target = $region12
      $region11: #{tpu_custom_call.1} parent=5 // pred_region
        %s345 = ssub.s32 %s27, 1
        // Predicated region
        $region13: #{tpu_custom_call.1} parent=11 // pred_check
          %p346 = pneg %p74
        $region14: #{tpu_custom_call.1} parent=11 // pred_check_branch
          %348 = sbr.rel (%p346) target = $region16
        $region15: #{tpu_custom_call.1} parent=11 // pred_region
          %s350 = ssub.s32 16, 16
          %351 = vsyncadd [#allocation3], %s350
          %s353 = sshll.u32 [#allocation2], 4
          %s354 = int_to_ptr.vmem [resolvable:$true] %s353
          %356 = dma.hbm_to_vmem [thread:$0]  %s1, 16, %s354, [#allocation3]
        $region16: #{tpu_custom_call.1} parent=11 // pred_fallthru
          _
        // Predicated region
        $region17: #{tpu_custom_call.1} parent=11 // pred_check
          %p357 = pneg %p95
        $region18: #{tpu_custom_call.1} parent=11 // pred_check_branch
          %359 = sbr.rel (%p357) target = $region20
        $region19: #{tpu_custom_call.1} parent=11 // pred_region
          _
        $region20: #{tpu_custom_call.1} parent=11 // pred_fallthru
          _
        // Predicated region
        $region21: #{tpu_custom_call.1} parent=11 // pred_check
          %p360 = pneg %p116
        $region22: #{tpu_custom_call.1} parent=11 // pred_check_branch
          %362 = sbr.rel (%p360) target = $region24
        $region23: #{tpu_custom_call.1} parent=11 // pred_region
          %s364 = ssub.s32 16, 16
          %365 = vsyncadd [#allocation6], %s364
          %s367 = sshll.u32 [#allocation5], 4
          %s368 = int_to_ptr.vmem [resolvable:$true] %s367
          %370 = dma.hbm_to_vmem [thread:$0]  %s3, 16, %s368, [#allocation6]
        $region24: #{tpu_custom_call.1} parent=11 // pred_fallthru
          _
        // Predicated region
        $region25: #{tpu_custom_call.1} parent=11 // pred_check
          %p371 = pneg %p137
        $region26: #{tpu_custom_call.1} parent=11 // pred_check_branch
          %373 = sbr.rel (%p371) target = $region28
        $region27: #{tpu_custom_call.1} parent=11 // pred_region
          _
        $region28: #{tpu_custom_call.1} parent=11 // pred_fallthru
          _
        // Predicated region
        $region29: #{tpu_custom_call.1} parent=11 // pred_check
          %p374 = pneg %p158
        $region30: #{tpu_custom_call.1} parent=11 // pred_check_branch
          %376 = sbr.rel (%p374) target = $region32
        $region31: #{tpu_custom_call.1} parent=11 // pred_region
          %s378 = ssub.s32 16, 16
          %379 = vsyncadd [#allocation6], %s378
          %s381 = sshll.u32 [#allocation7], 4
          %s382 = int_to_ptr.vmem [resolvable:$true] %s381
          %384 = dma.hbm_to_vmem [thread:$0]  %s5, 16, %s382, [#allocation6]
        $region32: #{tpu_custom_call.1} parent=11 // pred_fallthru
          _
        // Predicated region
        $region33: #{tpu_custom_call.1} parent=11 // pred_check
          %p385 = pneg %p179
        $region34: #{tpu_custom_call.1} parent=11 // pred_check_branch
          %387 = sbr.rel (%p385) target = $region36
        $region35: #{tpu_custom_call.1} parent=11 // pred_region
          %s389 = ssub.s32 16, 16
          %390 = vsyncadd [#allocation9], %s389
          %s392 = sshll.u32 [#allocation8], 4
          %s393 = int_to_ptr.vmem [resolvable:$true] %s392
          %395 = dma.hbm_to_vmem [thread:$0]  %s6, 16, %s393, [#allocation9]
        $region36: #{tpu_custom_call.1} parent=11 // pred_fallthru
          _
        // Predicated region
        $region37: #{tpu_custom_call.1} parent=11 // pred_check
          %p396 = pneg %p200
        $region38: #{tpu_custom_call.1} parent=11 // pred_check_branch
          %398 = sbr.rel (%p396) target = $region40
        $region39: #{tpu_custom_call.1} parent=11 // pred_region
          _
        $region40: #{tpu_custom_call.1} parent=11 // pred_fallthru
          _
        // Predicated region
        $region41: #{tpu_custom_call.1} parent=11 // pred_check
          %p399 = pneg %p221
        $region42: #{tpu_custom_call.1} parent=11 // pred_check_branch
          %401 = sbr.rel (%p399) target = $region44
        $region43: #{tpu_custom_call.1} parent=11 // pred_region
          %s403 = ssub.s32 256, 256
          %404 = vsyncadd [#allocation9], %s403
          %s405 = sshll.u32 [#allocation10], 4
          %s406 = int_to_ptr.vmem [resolvable:$true] %s405
          %411 = dma.hbm_to_vmem [thread:$0]  %s8, 256, %s406, [#allocation9], 64, 64, 4
        $region44: #{tpu_custom_call.1} parent=11 // pred_fallthru
          _
        // Predicated region
        $region45: #{tpu_custom_call.1} parent=11 // pred_check
          %p412 = pneg %p242
        $region46: #{tpu_custom_call.1} parent=11 // pred_check_branch
          %414 = sbr.rel (%p412) target = $region48
        $region47: #{tpu_custom_call.1} parent=11 // pred_region
          _
        $region48: #{tpu_custom_call.1} parent=11 // pred_fallthru
          _
        // Predicated region
        $region49: #{tpu_custom_call.1} parent=11 // pred_check
          %p415 = pneg %p263
        $region50: #{tpu_custom_call.1} parent=11 // pred_check_branch
          %417 = sbr.rel (%p415) target = $region52
        $region51: #{tpu_custom_call.1} parent=11 // pred_region
          %s419 = ssub.s32 128, 128
          %420 = vsyncadd [#allocation12], %s419
          %s422 = sshll.u32 [#allocation11], 4
          %s423 = int_to_ptr.vmem [resolvable:$true] %s422
          %425 = dma.hbm_to_vmem [thread:$0]  %s10, 128, %s423, [#allocation12]
        $region52: #{tpu_custom_call.1} parent=11 // pred_fallthru
          _
        // Predicated region
        $region53: #{tpu_custom_call.1} parent=11 // pred_check
          %p426 = pneg %p284
        $region54: #{tpu_custom_call.1} parent=11 // pred_check_branch
          %428 = sbr.rel (%p426) target = $region56
        $region55: #{tpu_custom_call.1} parent=11 // pred_region
          %s430 = ssub.s32 128, 128
          %431 = vsyncadd [#allocation12], %s430
          %s433 = sshll.u32 [#allocation13], 4
          %s434 = int_to_ptr.vmem [resolvable:$true] %s433
          %436 = dma.hbm_to_vmem [thread:$0]  %s11, 128, %s434, [#allocation12]
        $region56: #{tpu_custom_call.1} parent=11 // pred_fallthru
          _
        // Predicated region
        $region57: #{tpu_custom_call.1} parent=11 // pred_check
          %p437 = pneg %p305
        $region58: #{tpu_custom_call.1} parent=11 // pred_check_branch
          %439 = sbr.rel (%p437) target = $region60
        $region59: #{tpu_custom_call.1} parent=11 // pred_region
          %s441 = ssub.s32 128, 128
          %442 = vsyncadd [#allocation15], %s441
          %s444 = sshll.u32 [#allocation14], 4
          %s445 = int_to_ptr.vmem [resolvable:$true] %s444
          %447 = dma.hbm_to_vmem [thread:$0]  %s12, 128, %s445, [#allocation15]
        $region60: #{tpu_custom_call.1} parent=11 // pred_fallthru
          _
      $region12: #{tpu_custom_call.1} parent=5 // pred_fallthru
        _
      %p448 = scmp.lt.s32.totalorder %s27, 2
      // Predicated region
      $region61: #{tpu_custom_call.1} parent=5 // pred_check
        %p449 = pneg %p448
      $region62: #{tpu_custom_call.1} parent=5 // pred_check_branch
        %451 = sbr.rel (%p449) target = $region64
      $region63: #{tpu_custom_call.1} parent=5 // pred_region
        // Predicated region
        $region65: #{tpu_custom_call.1} parent=63 // pred_check
          %p452 = pneg %p47
        $region66: #{tpu_custom_call.1} parent=63 // pred_check_branch
          %454 = sbr.rel (%p452) target = $region68
        $region67: #{tpu_custom_call.1} parent=63 // pred_region
          %p455 = scmp.lt.s32.totalorder %s27, 1
          %s456 = scalar_select %p455, %s27, 1
          %s457 = smul.addr %s456, 8
          %s458 = scalar_lea.vmem %s0, %s457
        $region68: #{tpu_custom_call.1} parent=63 // pred_fallthru
          _
      $region64: #{tpu_custom_call.1} parent=5 // pred_fallthru
        _
      %p459 = scmp.le.s32.totalorder 1, %s27
      %p460 = scmp.lt.s32.totalorder %s27, 3
      %p461 = pnand %p459, %p460
      %p462 = pneg %p461
      // Predicated region
      $region69: #{tpu_custom_call.1} parent=5 // pred_check
        _
      $region70: #{tpu_custom_call.1} parent=5 // pred_check_branch
        %464 = sbr.rel (%p461) target = $region72
      $region71: #{tpu_custom_call.1} parent=5 // pred_region
        %s465 = ssub.s32 %s27, 1
        // Predicated region
        $region73: #{tpu_custom_call.1} parent=71 // pred_check
          %p466 = pneg %p74
        $region74: #{tpu_custom_call.1} parent=71 // pred_check_branch
          %468 = sbr.rel (%p466) target = $region76
        $region75: #{tpu_custom_call.1} parent=71 // pred_region
          %469 = dma.done [#allocation3], 16
        $region76: #{tpu_custom_call.1} parent=71 // pred_fallthru
          _
        // Predicated region
        $region77: #{tpu_custom_call.1} parent=71 // pred_check
          %p470 = pneg %p116
        $region78: #{tpu_custom_call.1} parent=71 // pred_check_branch
          %472 = sbr.rel (%p470) target = $region80
        $region79: #{tpu_custom_call.1} parent=71 // pred_region
          %473 = dma.done [#allocation6], 16
        $region80: #{tpu_custom_call.1} parent=71 // pred_fallthru
          _
        // Predicated region
        $region81: #{tpu_custom_call.1} parent=71 // pred_check
          %p474 = pneg %p158
        $region82: #{tpu_custom_call.1} parent=71 // pred_check_branch
          %476 = sbr.rel (%p474) target = $region84
        $region83: #{tpu_custom_call.1} parent=71 // pred_region
          %477 = dma.done [#allocation6], 16
        $region84: #{tpu_custom_call.1} parent=71 // pred_fallthru
          _
        // Predicated region
        $region85: #{tpu_custom_call.1} parent=71 // pred_check
          %p478 = pneg %p179
        $region86: #{tpu_custom_call.1} parent=71 // pred_check_branch
          %480 = sbr.rel (%p478) target = $region88
        $region87: #{tpu_custom_call.1} parent=71 // pred_region
          %481 = dma.done [#allocation9], 16
        $region88: #{tpu_custom_call.1} parent=71 // pred_fallthru
          _
        // Predicated region
        $region89: #{tpu_custom_call.1} parent=71 // pred_check
          %p482 = pneg %p221
        $region90: #{tpu_custom_call.1} parent=71 // pred_check_branch
          %484 = sbr.rel (%p482) target = $region92
        $region91: #{tpu_custom_call.1} parent=71 // pred_region
          %485 = dma.done [#allocation9], 256
        $region92: #{tpu_custom_call.1} parent=71 // pred_fallthru
          _
        // Predicated region
        $region93: #{tpu_custom_call.1} parent=71 // pred_check
          %p486 = pneg %p263
        $region94: #{tpu_custom_call.1} parent=71 // pred_check_branch
          %488 = sbr.rel (%p486) target = $region96
        $region95: #{tpu_custom_call.1} parent=71 // pred_region
          %489 = dma.done [#allocation12], 128
        $region96: #{tpu_custom_call.1} parent=71 // pred_fallthru
          _
        // Predicated region
        $region97: #{tpu_custom_call.1} parent=71 // pred_check
          %p490 = pneg %p284
        $region98: #{tpu_custom_call.1} parent=71 // pred_check_branch
          %492 = sbr.rel (%p490) target = $region100
        $region99: #{tpu_custom_call.1} parent=71 // pred_region
          %493 = dma.done [#allocation12], 128
        $region100: #{tpu_custom_call.1} parent=71 // pred_fallthru
          _
        // Predicated region
        $region101: #{tpu_custom_call.1} parent=71 // pred_check
          %p494 = pneg %p305
        $region102: #{tpu_custom_call.1} parent=71 // pred_check_branch
          %496 = sbr.rel (%p494) target = $region104
        $region103: #{tpu_custom_call.1} parent=71 // pred_region
          %497 = dma.done [#allocation15], 128
        $region104: #{tpu_custom_call.1} parent=71 // pred_fallthru
          _
        %p498 = scmp.lt.s32.totalorder %s32, 1
        %s499 = scalar_select %p498, %s32, 1
        %s500 = smul.addr %s499, 8
        %s501 = scalar_lea.vmem %s0, %s500
        %p502 = pneg %p53
        %p503 = pneg %p50
        %p504 = pneg %p74
        %p505 = pneg %p71
        %p506 = pneg %p95
        %p507 = pneg %p92
        %p508 = pneg %p116
        %p509 = pneg %p113
        %p510 = pneg %p137
        %p511 = pneg %p134
        %p512 = pneg %p158
        %p513 = pneg %p155
        %p514 = pneg %p179
        %p515 = pneg %p176
        %p516 = pneg %p200
        %p517 = pneg %p197
        %p518 = pneg %p221
        %p519 = pneg %p218
        %p520 = pneg %p242
        %p521 = pneg %p239
        %p522 = pneg %p263
        %p523 = pneg %p260
        %p524 = pneg %p284
        %p525 = pneg %p281
        %p526 = pneg %p305
        %p527 = pneg %p302
        %p528 = pneg %p331
        %p529 = pneg %p328
        %s530 = sand.u32 %s318, 1
        %s531 = scalar_lea.sflag [#allocation4], %s530
        %s532 = sand.u32 %s318, 1
        %s533 = smul.addr %s532, 8
        %s534 = scalar_lea.vmem [#allocation16], %s533
        %p535 = scmp.lt.s32.totalorder %s32, 1
        %s536 = scalar_select %p535, %s32, 1
        %s537 = smul.addr %s536, 8
        %s538 = scalar_lea.vmem %s0, %s537
        %v540 = vld [vmem:[%s538] sm:$0xff]
        %v541 = vmul.f32 %v540, %v540
        %vm542 = vcmask 261120
        %v543 = vsel %vm542, %v541, 0.0
        %544 = vadd.xlane.f32.xlu0 %v543
        %v545 = vpop.xlane.xlu0 %544
        %v546 = vrcp.pop 32.0
        %v547 = vmul.f32 %v545, %v546
        %v548 = vadd.f32 %v547, 1e-06
        %v549 = vrsqrt.pop %v548
        %v550 = vmul.f32 %v540, %v549
        %v551 = vld [vmem:[#allocation2] sm:$0x1]
        %v553 = vlaneseq
        %v554 = vshrl.u32 %v553, 7
        %v555 = vsub.s32 0, %v554
        %v556 = vrot.slane %v551, %v555
        %v558 = vmul.f32 %v550, %v556
        %v559 = vpack.c.bf16 %v558, %v558
        %v560 = vld [vmem:[%s2] sm:$0xf]
        %v561 = vld [vmem:[%s2 + $0x4] sm:$0xf]
        %v562 = vld [vmem:[%s2 + $0x8] sm:$0xf]
        %v563 = vld [vmem:[%s2 + $0xc] sm:$0xf]
        %v564 = vld [vmem:[#allocation5] sm:$0x1]
        %v566 = vlaneseq
        %v567 = vshrl.u32 %v566, 7
        %v568 = vsub.s32 0, %v567
        %v569 = vrot.slane %v564, %v568
        %v575 = vunpack.c.l.b16 %v560
        %v576 = vunpack.c.l.b16 %v561
        %v577 = vunpack.c.l.b16 %v562
        %v578 = vunpack.c.l.b16 %v563
        %v579 = vpack.c.b16 %v576, %v575
        %v580 = vpack.c.b16 %v578, %v577
        %v584 = vsel %vm542, %v559, 0
        %586 = vmatprep.subr.bf16.mxu0 0
        %587 = vmatpush1.bf16.msra.mxu0 0
        %588 = vmatprep.subr.bf16.mxu0 0
        %589 = vmatpush1.bf16.msra.mxu0 0
        %590 = vmatprep.subr.bf16.mxu0 0
        %591 = vmatpush1.bf16.msra.mxu0 0
        %592 = vmatprep.subr.bf16.mxu0 0
        %593 = vmatpush1.bf16.msra.mxu0 0
        %594 = vmatprep.subr.bf16.mxu0 0
        %595 = vmatpush1.bf16.msra.mxu0 0
        %596 = vmatprep.subr.bf16.mxu0 0
        %597 = vmatpush1.bf16.msra.mxu0 0
        %598 = vmatprep.subr.bf16.mxu0 0
        %599 = vmatpush1.bf16.msra.mxu0 %v580
        %600 = vmatprep.subr.bf16.mxu0 0
        %601 = vmatpush1.bf16.msra.mxu0 %v579
        %602 = vmatprep.subr.bf16.mxu0 0
        %603 = vmatpush2.bf16.msra.mxu0 0
        %604 = vmatprep.subr.bf16.mxu0 0
        %605 = vmatpush2.bf16.msra.mxu0 0
        %606 = vmatprep.subr.bf16.mxu0 0
        %607 = vmatpush2.bf16.msra.mxu0 0
        %608 = vmatprep.subr.bf16.mxu0 0
        %609 = vmatpush2.bf16.msra.mxu0 0
        %610 = vmatprep.subr.bf16.mxu0 0
        %611 = vmatpush2.bf16.msra.mxu0 0
        %612 = vmatprep.subr.bf16.mxu0 0
        %613 = vmatpush2.bf16.msra.mxu0 0
        %614 = vmatprep.subr.bf16.mxu0 0
        %615 = vmatpush2.bf16.msra.mxu0 0
        %616 = vmatprep.subr.bf16.mxu0 0
        %617 = vmatpush2.bf16.msra.mxu0 0
        %618 = vmatprep.mubr.bf16.mxu0 0
        %619 = vmatmul.mubr.bf16.gmra.mxu0 %v584
        %v620 = vpop.f32.mrf.mxu0
        %v621 = vadd.f32 %v569, %v620
        %v622 = vpop.f32.mrf.mxu0
        %v623 = vpop.f32.mrf.mxu0
        %v624 = vpop.f32.mrf.mxu0
        %625 = vdwg.mxu0
        %627 = vrot.lane.b32.xlu0 %v621, 120
        %v628 = vpop.permute.xlu0 %627
        %630 = vrot.lane.b32.xlu0 %v621, 112
        %v631 = vpop.permute.xlu0 %630
        %633 = vrot.lane.b32.xlu0 %v621, 104
        %v634 = vpop.permute.xlu0 %633
        %v636 = vcombine.low %v621, %v631
        %v637 = vcombine.high %v621, %v631
        %v639 = vunpack.c.l.s4 1983009808
        %v640 = vunpack.c.0.s8 %v639
        %v641 = vlaneseq
        %v642 = vshrl.u32 %v641, 7
        %v643 = vsub.s32 %v640, %v642
        %v644 = vrot.slane %v636, %v643
        %v646 = vunpack.c.l.s4 1983009808
        %v647 = vunpack.c.0.s8 %v646
        %v648 = vlaneseq
        %v649 = vshrl.u32 %v648, 7
        %v650 = vsub.s32 %v647, %v649
        %v651 = vrot.slane %v637, %v650
        %v652 = vcombine.low %v628, %v634
        %v653 = vcombine.high %v628, %v634
        %v655 = vunpack.c.l.s4 1983009808
        %v656 = vunpack.c.0.s8 %v655
        %v657 = vlaneseq
        %v658 = vshrl.u32 %v657, 7
        %v659 = vsub.s32 %v656, %v658
        %v660 = vrot.slane %v652, %v659
        %v662 = vunpack.c.l.s4 1983009808
        %v663 = vunpack.c.0.s8 %v662
        %v664 = vlaneseq
        %v665 = vshrl.u32 %v664, 7
        %v666 = vsub.s32 %v663, %v665
        %v667 = vrot.slane %v653, %v666
        %v668 = vcombine.low %v644, %v660
        %v669 = vcombine.high %v644, %v660
        %v671 = vunpack.c.l.s4 1934713408
        %v672 = vunpack.c.0.s8 %v671
        %v673 = vlaneseq
        %v674 = vshrl.u32 %v673, 7
        %v675 = vsub.s32 %v672, %v674
        %v676 = vrot.slane %v668, %v675
        %v678 = vunpack.c.l.s4 1934713408
        %v679 = vunpack.c.0.s8 %v678
        %v680 = vlaneseq
        %v681 = vshrl.u32 %v680, 7
        %v682 = vsub.s32 %v679, %v681
        %v683 = vrot.slane %v669, %v682
        %v684 = vcombine.low %v651, %v667
        %v685 = vcombine.high %v651, %v667
        %v687 = vunpack.c.l.s4 1934713408
        %v688 = vunpack.c.0.s8 %v687
        %v689 = vlaneseq
        %v690 = vshrl.u32 %v689, 7
        %v691 = vsub.s32 %v688, %v690
        %v692 = vrot.slane %v684, %v691
        %v694 = vunpack.c.l.s4 1934713408
        %v695 = vunpack.c.0.s8 %v694
        %v696 = vlaneseq
        %v697 = vshrl.u32 %v696, 7
        %v698 = vsub.s32 %v695, %v697
        %v699 = vrot.slane %v685, %v698
        %v700 = vcombine.high %v676, 0.0
        %v701 = vcombine.high %v683, 0.0
        %v702 = vcombine.high %v692, 0.0
        %v703 = vcombine.high %v699, 0.0
        %704 = vrot.lane.b32.xlu0 %v621, 96
        %v705 = vpop.permute.xlu0 %704
        %706 = vrot.lane.b32.xlu0 %v628, 96
        %v707 = vpop.permute.xlu0 %706
        %708 = vrot.lane.b32.xlu0 %v631, 96
        %v709 = vpop.permute.xlu0 %708
        %710 = vrot.lane.b32.xlu0 %v634, 96
        %v711 = vpop.permute.xlu0 %710
        %v716 = vcombine.low %v705, %v709
        %v717 = vcombine.high %v705, %v709
        %v719 = vunpack.c.l.s4 1983009808
        %v720 = vunpack.c.0.s8 %v719
        %v721 = vlaneseq
        %v722 = vshrl.u32 %v721, 7
        %v723 = vsub.s32 %v720, %v722
        %v724 = vrot.slane %v716, %v723
        %v726 = vunpack.c.l.s4 1983009808
        %v727 = vunpack.c.0.s8 %v726
        %v728 = vlaneseq
        %v729 = vshrl.u32 %v728, 7
        %v730 = vsub.s32 %v727, %v729
        %v731 = vrot.slane %v717, %v730
        %v732 = vcombine.low %v707, %v711
        %v733 = vcombine.high %v707, %v711
        %v735 = vunpack.c.l.s4 1983009808
        %v736 = vunpack.c.0.s8 %v735
        %v737 = vlaneseq
        %v738 = vshrl.u32 %v737, 7
        %v739 = vsub.s32 %v736, %v738
        %v740 = vrot.slane %v732, %v739
        %v742 = vunpack.c.l.s4 1983009808
        %v743 = vunpack.c.0.s8 %v742
        %v744 = vlaneseq
        %v745 = vshrl.u32 %v744, 7
        %v746 = vsub.s32 %v743, %v745
        %v747 = vrot.slane %v733, %v746
        %v748 = vcombine.low %v724, %v740
        %v749 = vcombine.high %v724, %v740
        %v751 = vunpack.c.l.s4 1934713408
        %v752 = vunpack.c.0.s8 %v751
        %v753 = vlaneseq
        %v754 = vshrl.u32 %v753, 7
        %v755 = vsub.s32 %v752, %v754
        %v756 = vrot.slane %v748, %v755
        %v758 = vunpack.c.l.s4 1934713408
        %v759 = vunpack.c.0.s8 %v758
        %v760 = vlaneseq
        %v761 = vshrl.u32 %v760, 7
        %v762 = vsub.s32 %v759, %v761
        %v763 = vrot.slane %v749, %v762
        %v764 = vcombine.low %v731, %v747
        %v765 = vcombine.high %v731, %v747
        %v767 = vunpack.c.l.s4 1934713408
        %v768 = vunpack.c.0.s8 %v767
        %v769 = vlaneseq
        %v770 = vshrl.u32 %v769, 7
        %v771 = vsub.s32 %v768, %v770
        %v772 = vrot.slane %v764, %v771
        %v774 = vunpack.c.l.s4 1934713408
        %v775 = vunpack.c.0.s8 %v774
        %v776 = vlaneseq
        %v777 = vshrl.u32 %v776, 7
        %v778 = vsub.s32 %v775, %v777
        %v779 = vrot.slane %v765, %v778
        %v780 = vcombine.high %v756, 0.0
        %v781 = vcombine.high %v763, 0.0
        %v782 = vcombine.high %v772, 0.0
        %v783 = vcombine.high %v779, 0.0
        %784 = vrot.lane.b32.xlu0 %v621, 64
        %v785 = vpop.permute.xlu0 %784
        %786 = vrot.lane.b32.xlu0 %v628, 64
        %v787 = vpop.permute.xlu0 %786
        %788 = vrot.lane.b32.xlu0 %v631, 64
        %v789 = vpop.permute.xlu0 %788
        %790 = vrot.lane.b32.xlu0 %v634, 64
        %v791 = vpop.permute.xlu0 %790
        %v796 = vcombine.low %v785, %v789
        %v797 = vcombine.high %v785, %v789
        %v799 = vunpack.c.l.s4 1983009808
        %v800 = vunpack.c.0.s8 %v799
        %v801 = vlaneseq
        %v802 = vshrl.u32 %v801, 7
        %v803 = vsub.s32 %v800, %v802
        %v804 = vrot.slane %v796, %v803
        %v806 = vunpack.c.l.s4 1983009808
        %v807 = vunpack.c.0.s8 %v806
        %v808 = vlaneseq
        %v809 = vshrl.u32 %v808, 7
        %v810 = vsub.s32 %v807, %v809
        %v811 = vrot.slane %v797, %v810
        %v812 = vcombine.low %v787, %v791
        %v813 = vcombine.high %v787, %v791
        %v815 = vunpack.c.l.s4 1983009808
        %v816 = vunpack.c.0.s8 %v815
        %v817 = vlaneseq
        %v818 = vshrl.u32 %v817, 7
        %v819 = vsub.s32 %v816, %v818
        %v820 = vrot.slane %v812, %v819
        %v822 = vunpack.c.l.s4 1983009808
        %v823 = vunpack.c.0.s8 %v822
        %v824 = vlaneseq
        %v825 = vshrl.u32 %v824, 7
        %v826 = vsub.s32 %v823, %v825
        %v827 = vrot.slane %v813, %v826
        %v828 = vcombine.low %v804, %v820
        %v829 = vcombine.high %v804, %v820
        %v831 = vunpack.c.l.s4 1934713408
        %v832 = vunpack.c.0.s8 %v831
        %v833 = vlaneseq
        %v834 = vshrl.u32 %v833, 7
        %v835 = vsub.s32 %v832, %v834
        %v836 = vrot.slane %v828, %v835
        %v838 = vunpack.c.l.s4 1934713408
        %v839 = vunpack.c.0.s8 %v838
        %v840 = vlaneseq
        %v841 = vshrl.u32 %v840, 7
        %v842 = vsub.s32 %v839, %v841
        %v843 = vrot.slane %v829, %v842
        %v844 = vcombine.low %v811, %v827
        %v845 = vcombine.high %v811, %v827
        %v847 = vunpack.c.l.s4 1934713408
        %v848 = vunpack.c.0.s8 %v847
        %v849 = vlaneseq
        %v850 = vshrl.u32 %v849, 7
        %v851 = vsub.s32 %v848, %v850
        %v852 = vrot.slane %v844, %v851
        %v854 = vunpack.c.l.s4 1934713408
        %v855 = vunpack.c.0.s8 %v854
        %v856 = vlaneseq
        %v857 = vshrl.u32 %v856, 7
        %v858 = vsub.s32 %v855, %v857
        %v859 = vrot.slane %v845, %v858
        %v860 = vcombine.high %v836, 0.0
        %v861 = vcombine.high %v843, 0.0
        %v862 = vcombine.high %v852, 0.0
        %v863 = vcombine.high %v859, 0.0
        %v864 = vld [vmem:[#allocation11] sm:$0xff]
        %v866 = vcombine.high %v864, %v864
        %v868 = vunpack.c.l.s4 1966171168
        %v869 = vunpack.c.0.s8 %v868
        %v870 = vlaneseq
        %v871 = vshrl.u32 %v870, 7
        %v872 = vsub.s32 %v869, %v871
        %v873 = vrot.slane %v864, %v872
        %v875 = vunpack.c.l.s4 1966171168
        %v876 = vunpack.c.0.s8 %v875
        %v877 = vlaneseq
        %v878 = vshrl.u32 %v877, 7
        %v879 = vsub.s32 %v876, %v878
        %v880 = vrot.slane %v866, %v879
        %v881 = vcombine.high %v873, %v873
        %v882 = vcombine.high %v880, %v880
        %v884 = vunpack.c.l.s4 1966171168
        %v885 = vunpack.c.0.s8 %v884
        %v886 = vlaneseq
        %v887 = vshrl.u32 %v886, 7
        %v888 = vsub.s32 %v885, %v887
        %v889 = vrot.slane %v873, %v888
        %v891 = vunpack.c.l.s4 1966171168
        %v892 = vunpack.c.0.s8 %v891
        %v893 = vlaneseq
        %v894 = vshrl.u32 %v893, 7
        %v895 = vsub.s32 %v892, %v894
        %v896 = vrot.slane %v880, %v895
        %v898 = vunpack.c.l.s4 1966171168
        %v899 = vunpack.c.0.s8 %v898
        %v900 = vlaneseq
        %v901 = vshrl.u32 %v900, 7
        %v902 = vsub.s32 %v899, %v901
        %v903 = vrot.slane %v881, %v902
        %v905 = vunpack.c.l.s4 1966171168
        %v906 = vunpack.c.0.s8 %v905
        %v907 = vlaneseq
        %v908 = vshrl.u32 %v907, 7
        %v909 = vsub.s32 %v906, %v908
        %v910 = vrot.slane %v882, %v909
        %v911 = vcombine.high %v889, %v889
        %v912 = vcombine.high %v896, %v896
        %v913 = vcombine.high %v903, %v903
        %v914 = vcombine.high %v910, %v910
        %v915 = vld [vmem:[#allocation13] sm:$0xff]
        %v917 = vcombine.high %v915, %v915
        %v919 = vunpack.c.l.s4 1966171168
        %v920 = vunpack.c.0.s8 %v919
        %v921 = vlaneseq
        %v922 = vshrl.u32 %v921, 7
        %v923 = vsub.s32 %v920, %v922
        %v924 = vrot.slane %v915, %v923
        %v926 = vunpack.c.l.s4 1966171168
        %v927 = vunpack.c.0.s8 %v926
        %v928 = vlaneseq
        %v929 = vshrl.u32 %v928, 7
        %v930 = vsub.s32 %v927, %v929
        %v931 = vrot.slane %v917, %v930
        %v932 = vcombine.high %v924, %v924
        %v933 = vcombine.high %v931, %v931
        %v935 = vunpack.c.l.s4 1966171168
        %v936 = vunpack.c.0.s8 %v935
        %v937 = vlaneseq
        %v938 = vshrl.u32 %v937, 7
        %v939 = vsub.s32 %v936, %v938
        %v940 = vrot.slane %v924, %v939
        %v942 = vunpack.c.l.s4 1966171168
        %v943 = vunpack.c.0.s8 %v942
        %v944 = vlaneseq
        %v945 = vshrl.u32 %v944, 7
        %v946 = vsub.s32 %v943, %v945
        %v947 = vrot.slane %v931, %v946
        %v949 = vunpack.c.l.s4 1966171168
        %v950 = vunpack.c.0.s8 %v949
        %v951 = vlaneseq
        %v952 = vshrl.u32 %v951, 7
        %v953 = vsub.s32 %v950, %v952
        %v954 = vrot.slane %v932, %v953
        %v956 = vunpack.c.l.s4 1966171168
        %v957 = vunpack.c.0.s8 %v956
        %v958 = vlaneseq
        %v959 = vshrl.u32 %v958, 7
        %v960 = vsub.s32 %v957, %v959
        %v961 = vrot.slane %v933, %v960
        %v962 = vcombine.high %v940, %v940
        %v963 = vcombine.high %v947, %v947
        %v964 = vcombine.high %v954, %v954
        %v965 = vcombine.high %v961, %v961
        %974 = vrot.lane.b32.xlu0 %v676, 124
        %v975 = vpop.permute.xlu0 %974
        %976 = vrot.lane.b32.xlu0 %v700, 124
        %v977 = vpop.permute.xlu0 %976
        %978 = vrot.lane.b32.xlu0 %v683, 124
        %v979 = vpop.permute.xlu0 %978
        %980 = vrot.lane.b32.xlu0 %v701, 124
        %v981 = vpop.permute.xlu0 %980
        %982 = vrot.lane.b32.xlu0 %v692, 124
        %v983 = vpop.permute.xlu0 %982
        %984 = vrot.lane.b32.xlu0 %v702, 124
        %v985 = vpop.permute.xlu0 %984
        %986 = vrot.lane.b32.xlu0 %v699, 124
        %v987 = vpop.permute.xlu0 %986
        %988 = vrot.lane.b32.xlu0 %v703, 124
        %v989 = vpop.permute.xlu0 %988
        %998 = vrot.lane.b32.xlu0 %v676, 4
        %v999 = vpop.permute.xlu0 %998
        %1000 = vrot.lane.b32.xlu0 %v700, 4
        %v1001 = vpop.permute.xlu0 %1000
        %1002 = vrot.lane.b32.xlu0 %v683, 4
        %v1003 = vpop.permute.xlu0 %1002
        %1004 = vrot.lane.b32.xlu0 %v701, 4
        %v1005 = vpop.permute.xlu0 %1004
        %1006 = vrot.lane.b32.xlu0 %v692, 4
        %v1007 = vpop.permute.xlu0 %1006
        %1008 = vrot.lane.b32.xlu0 %v702, 4
        %v1009 = vpop.permute.xlu0 %1008
        %1010 = vrot.lane.b32.xlu0 %v699, 4
        %v1011 = vpop.permute.xlu0 %1010
        %1012 = vrot.lane.b32.xlu0 %v703, 4
        %v1013 = vpop.permute.xlu0 %1012
        %vm1022 = vcmask 31744
        %v1023 = vsel %vm1022, %v975, %v999
        %v1024 = vsel %vm1022, %v977, %v1001
        %v1025 = vsel %vm1022, %v979, %v1003
        %v1026 = vsel %vm1022, %v981, %v1005
        %v1027 = vsel %vm1022, %v983, %v1007
        %v1028 = vsel %vm1022, %v985, %v1009
        %v1029 = vsel %vm1022, %v987, %v1011
        %v1030 = vsel %vm1022, %v989, %v1013
        %v1031 = vlaneseq
        %v1032 = vshrl.u32 %v1031, 7
        %v1033 = vsub.s32 0, %v1032
        %v1034 = vrot.slane %v889, %v1033
        %v1035 = vlaneseq
        %v1036 = vshrl.u32 %v1035, 7
        %v1037 = vsub.s32 0, %v1036
        %v1038 = vrot.slane %v903, %v1037
        %v1039 = vlaneseq
        %v1040 = vshrl.u32 %v1039, 7
        %v1041 = vsub.s32 0, %v1040
        %v1042 = vrot.slane %v911, %v1041
        %v1043 = vlaneseq
        %v1044 = vshrl.u32 %v1043, 7
        %v1045 = vsub.s32 0, %v1044
        %v1046 = vrot.slane %v913, %v1045
        %v1047 = vlaneseq
        %v1048 = vshrl.u32 %v1047, 7
        %v1049 = vsub.s32 0, %v1048
        %v1050 = vrot.slane %v896, %v1049
        %v1051 = vlaneseq
        %v1052 = vshrl.u32 %v1051, 7
        %v1053 = vsub.s32 0, %v1052
        %v1054 = vrot.slane %v910, %v1053
        %v1055 = vlaneseq
        %v1056 = vshrl.u32 %v1055, 7
        %v1057 = vsub.s32 0, %v1056
        %v1058 = vrot.slane %v912, %v1057
        %v1059 = vlaneseq
        %v1060 = vshrl.u32 %v1059, 7
        %v1061 = vsub.s32 0, %v1060
        %v1062 = vrot.slane %v914, %v1061
        %v1071 = vmul.f32 %v676, %v1034
        %v1072 = vmul.f32 %v700, %v1038
        %v1073 = vmul.f32 %v683, %v1042
        %v1074 = vmul.f32 %v701, %v1046
        %v1075 = vmul.f32 %v692, %v1050
        %v1076 = vmul.f32 %v702, %v1054
        %v1077 = vmul.f32 %v699, %v1058
        %v1078 = vmul.f32 %v703, %v1062
        %v1079 = vlaneseq
        %v1080 = vshrl.u32 %v1079, 7
        %v1081 = vsub.s32 0, %v1080
        %v1082 = vrot.slane %v940, %v1081
        %v1083 = vlaneseq
        %v1084 = vshrl.u32 %v1083, 7
        %v1085 = vsub.s32 0, %v1084
        %v1086 = vrot.slane %v954, %v1085
        %v1087 = vlaneseq
        %v1088 = vshrl.u32 %v1087, 7
        %v1089 = vsub.s32 0, %v1088
        %v1090 = vrot.slane %v962, %v1089
        %v1091 = vlaneseq
        %v1092 = vshrl.u32 %v1091, 7
        %v1093 = vsub.s32 0, %v1092
        %v1094 = vrot.slane %v964, %v1093
        %v1095 = vlaneseq
        %v1096 = vshrl.u32 %v1095, 7
        %v1097 = vsub.s32 0, %v1096
        %v1098 = vrot.slane %v947, %v1097
        %v1099 = vlaneseq
        %v1100 = vshrl.u32 %v1099, 7
        %v1101 = vsub.s32 0, %v1100
        %v1102 = vrot.slane %v961, %v1101
        %v1103 = vlaneseq
        %v1104 = vshrl.u32 %v1103, 7
        %v1105 = vsub.s32 0, %v1104
        %v1106 = vrot.slane %v963, %v1105
        %v1107 = vlaneseq
        %v1108 = vshrl.u32 %v1107, 7
        %v1109 = vsub.s32 0, %v1108
        %v1110 = vrot.slane %v965, %v1109
        %v1119 = vmul.f32 %v1023, %v1082
        %v1120 = vmul.f32 %v1024, %v1086
        %v1121 = vmul.f32 %v1025, %v1090
        %v1122 = vmul.f32 %v1026, %v1094
        %v1123 = vmul.f32 %v1027, %v1098
        %v1124 = vmul.f32 %v1028, %v1102
        %v1125 = vmul.f32 %v1029, %v1106
        %v1126 = vmul.f32 %v1030, %v1110
        %v1127 = vadd.f32 %v1071, %v1119
        %v1128 = vadd.f32 %v1072, %v1120
        %v1129 = vadd.f32 %v1073, %v1121
        %v1130 = vadd.f32 %v1074, %v1122
        %v1131 = vadd.f32 %v1075, %v1123
        %v1132 = vadd.f32 %v1076, %v1124
        %v1133 = vadd.f32 %v1077, %v1125
        %v1134 = vadd.f32 %v1078, %v1126
        %1143 = vrot.lane.b32.xlu0 %v756, 124
        %v1144 = vpop.permute.xlu0 %1143
        %1145 = vrot.lane.b32.xlu0 %v780, 124
        %v1146 = vpop.permute.xlu0 %1145
        %1147 = vrot.lane.b32.xlu0 %v763, 124
        %v1148 = vpop.permute.xlu0 %1147
        %1149 = vrot.lane.b32.xlu0 %v781, 124
        %v1150 = vpop.permute.xlu0 %1149
        %1151 = vrot.lane.b32.xlu0 %v772, 124
        %v1152 = vpop.permute.xlu0 %1151
        %1153 = vrot.lane.b32.xlu0 %v782, 124
        %v1154 = vpop.permute.xlu0 %1153
        %1155 = vrot.lane.b32.xlu0 %v779, 124
        %v1156 = vpop.permute.xlu0 %1155
        %1157 = vrot.lane.b32.xlu0 %v783, 124
        %v1158 = vpop.permute.xlu0 %1157
        %1167 = vrot.lane.b32.xlu0 %v756, 4
        %v1168 = vpop.permute.xlu0 %1167
        %1169 = vrot.lane.b32.xlu0 %v780, 4
        %v1170 = vpop.permute.xlu0 %1169
        %1171 = vrot.lane.b32.xlu0 %v763, 4
        %v1172 = vpop.permute.xlu0 %1171
        %1173 = vrot.lane.b32.xlu0 %v781, 4
        %v1174 = vpop.permute.xlu0 %1173
        %1175 = vrot.lane.b32.xlu0 %v772, 4
        %v1176 = vpop.permute.xlu0 %1175
        %1177 = vrot.lane.b32.xlu0 %v782, 4
        %v1178 = vpop.permute.xlu0 %1177
        %1179 = vrot.lane.b32.xlu0 %v779, 4
        %v1180 = vpop.permute.xlu0 %1179
        %1181 = vrot.lane.b32.xlu0 %v783, 4
        %v1182 = vpop.permute.xlu0 %1181
        %v1191 = vsel %vm1022, %v1144, %v1168
        %v1192 = vsel %vm1022, %v1146, %v1170
        %v1193 = vsel %vm1022, %v1148, %v1172
        %v1194 = vsel %vm1022, %v1150, %v1174
        %v1195 = vsel %vm1022, %v1152, %v1176
        %v1196 = vsel %vm1022, %v1154, %v1178
        %v1197 = vsel %vm1022, %v1156, %v1180
        %v1198 = vsel %vm1022, %v1158, %v1182
        %v1199 = vmul.f32 %v756, %v1034
        %v1200 = vmul.f32 %v780, %v1038
        %v1201 = vmul.f32 %v763, %v1042
        %v1202 = vmul.f32 %v781, %v1046
        %v1203 = vmul.f32 %v772, %v1050
        %v1204 = vmul.f32 %v782, %v1054
        %v1205 = vmul.f32 %v779, %v1058
        %v1206 = vmul.f32 %v783, %v1062
        %v1207 = vmul.f32 %v1191, %v1082
        %v1208 = vmul.f32 %v1192, %v1086
        %v1209 = vmul.f32 %v1193, %v1090
        %v1210 = vmul.f32 %v1194, %v1094
        %v1211 = vmul.f32 %v1195, %v1098
        %v1212 = vmul.f32 %v1196, %v1102
        %v1213 = vmul.f32 %v1197, %v1106
        %v1214 = vmul.f32 %v1198, %v1110
        %v1215 = vadd.f32 %v1199, %v1207
        %v1216 = vadd.f32 %v1200, %v1208
        %v1217 = vadd.f32 %v1201, %v1209
        %v1218 = vadd.f32 %v1202, %v1210
        %v1219 = vadd.f32 %v1203, %v1211
        %v1220 = vadd.f32 %v1204, %v1212
        %v1221 = vadd.f32 %v1205, %v1213
        %v1222 = vadd.f32 %v1206, %v1214
        %v1223 = vcombine.low %v1127, %v1129
        %v1225 = vunpack.c.l.s4 1983009808
        %v1226 = vunpack.c.0.s8 %v1225
        %v1227 = vlaneseq
        %v1228 = vshrl.u32 %v1227, 7
        %v1229 = vsub.s32 %v1226, %v1228
        %v1230 = vrot.slane %v1223, %v1229
        %v1231 = vcombine.low %v1128, %v1130
        %v1233 = vunpack.c.l.s4 1983009808
        %v1234 = vunpack.c.0.s8 %v1233
        %v1235 = vlaneseq
        %v1236 = vshrl.u32 %v1235, 7
        %v1237 = vsub.s32 %v1234, %v1236
        %v1238 = vrot.slane %v1231, %v1237
        %v1239 = vcombine.low %v1131, %v1133
        %v1241 = vunpack.c.l.s4 1983009808
        %v1242 = vunpack.c.0.s8 %v1241
        %v1243 = vlaneseq
        %v1244 = vshrl.u32 %v1243, 7
        %v1245 = vsub.s32 %v1242, %v1244
        %v1246 = vrot.slane %v1239, %v1245
        %v1247 = vcombine.low %v1132, %v1134
        %v1249 = vunpack.c.l.s4 1983009808
        %v1250 = vunpack.c.0.s8 %v1249
        %v1251 = vlaneseq
        %v1252 = vshrl.u32 %v1251, 7
        %v1253 = vsub.s32 %v1250, %v1252
        %v1254 = vrot.slane %v1247, %v1253
        %v1255 = vcombine.low %v1230, %v1238
        %v1256 = vcombine.high %v1230, %v1238
        %v1258 = vunpack.c.l.s4 1934713408
        %v1259 = vunpack.c.0.s8 %v1258
        %v1260 = vlaneseq
        %v1261 = vshrl.u32 %v1260, 7
        %v1262 = vsub.s32 %v1259, %v1261
        %v1263 = vrot.slane %v1255, %v1262
        %v1265 = vunpack.c.l.s4 1934713408
        %v1266 = vunpack.c.0.s8 %v1265
        %v1267 = vlaneseq
        %v1268 = vshrl.u32 %v1267, 7
        %v1269 = vsub.s32 %v1266, %v1268
        %v1270 = vrot.slane %v1256, %v1269
        %v1271 = vcombine.low %v1246, %v1254
        %v1272 = vcombine.high %v1246, %v1254
        %v1274 = vunpack.c.l.s4 1934713408
        %v1275 = vunpack.c.0.s8 %v1274
        %v1276 = vlaneseq
        %v1277 = vshrl.u32 %v1276, 7
        %v1278 = vsub.s32 %v1275, %v1277
        %v1279 = vrot.slane %v1271, %v1278
        %v1281 = vunpack.c.l.s4 1934713408
        %v1282 = vunpack.c.0.s8 %v1281
        %v1283 = vlaneseq
        %v1284 = vshrl.u32 %v1283, 7
        %v1285 = vsub.s32 %v1282, %v1284
        %v1286 = vrot.slane %v1272, %v1285
        %v1287 = vcombine.low %v1263, %v1279
        %v1288 = vcombine.high %v1263, %v1279
        %v1289 = vcombine.low %v1270, %v1286
        %v1290 = vcombine.high %v1270, %v1286
        %v1291 = vpack.c.bf16 %v1287, %v1287
        %v1292 = vpack.c.bf16 %v1288, %v1288
        %v1293 = vpack.c.bf16 %v1289, %v1289
        %v1294 = vpack.c.bf16 %v1290, %v1290
        %v1295 = vcombine.low %v1215, %v1217
        %v1297 = vunpack.c.l.s4 1983009808
        %v1298 = vunpack.c.0.s8 %v1297
        %v1299 = vlaneseq
        %v1300 = vshrl.u32 %v1299, 7
        %v1301 = vsub.s32 %v1298, %v1300
        %v1302 = vrot.slane %v1295, %v1301
        %v1303 = vcombine.low %v1216, %v1218
        %v1305 = vunpack.c.l.s4 1983009808
        %v1306 = vunpack.c.0.s8 %v1305
        %v1307 = vlaneseq
        %v1308 = vshrl.u32 %v1307, 7
        %v1309 = vsub.s32 %v1306, %v1308
        %v1310 = vrot.slane %v1303, %v1309
        %v1311 = vcombine.low %v1219, %v1221
        %v1313 = vunpack.c.l.s4 1983009808
        %v1314 = vunpack.c.0.s8 %v1313
        %v1315 = vlaneseq
        %v1316 = vshrl.u32 %v1315, 7
        %v1317 = vsub.s32 %v1314, %v1316
        %v1318 = vrot.slane %v1311, %v1317
        %v1319 = vcombine.low %v1220, %v1222
        %v1321 = vunpack.c.l.s4 1983009808
        %v1322 = vunpack.c.0.s8 %v1321
        %v1323 = vlaneseq
        %v1324 = vshrl.u32 %v1323, 7
        %v1325 = vsub.s32 %v1322, %v1324
        %v1326 = vrot.slane %v1319, %v1325
        %v1327 = vcombine.low %v1302, %v1310
        %v1328 = vcombine.high %v1302, %v1310
        %v1330 = vunpack.c.l.s4 1934713408
        %v1331 = vunpack.c.0.s8 %v1330
        %v1332 = vlaneseq
        %v1333 = vshrl.u32 %v1332, 7
        %v1334 = vsub.s32 %v1331, %v1333
        %v1335 = vrot.slane %v1327, %v1334
        %v1337 = vunpack.c.l.s4 1934713408
        %v1338 = vunpack.c.0.s8 %v1337
        %v1339 = vlaneseq
        %v1340 = vshrl.u32 %v1339, 7
        %v1341 = vsub.s32 %v1338, %v1340
        %v1342 = vrot.slane %v1328, %v1341
        %v1343 = vcombine.low %v1318, %v1326
        %v1344 = vcombine.high %v1318, %v1326
        %v1346 = vunpack.c.l.s4 1934713408
        %v1347 = vunpack.c.0.s8 %v1346
        %v1348 = vlaneseq
        %v1349 = vshrl.u32 %v1348, 7
        %v1350 = vsub.s32 %v1347, %v1349
        %v1351 = vrot.slane %v1343, %v1350
        %v1353 = vunpack.c.l.s4 1934713408
        %v1354 = vunpack.c.0.s8 %v1353
        %v1355 = vlaneseq
        %v1356 = vshrl.u32 %v1355, 7
        %v1357 = vsub.s32 %v1354, %v1356
        %v1358 = vrot.slane %v1344, %v1357
        %v1359 = vcombine.low %v1335, %v1351
        %v1360 = vcombine.high %v1335, %v1351
        %v1361 = vcombine.low %v1342, %v1358
        %v1362 = vcombine.high %v1342, %v1358
        %v1363 = vpack.c.bf16 %v1359, %v1359
        %v1364 = vpack.c.bf16 %v1360, %v1360
        %v1365 = vpack.c.bf16 %v1361, %v1361
        %v1366 = vpack.c.bf16 %v1362, %v1362
        %v1367 = vcombine.low %v836, %v843
        %v1369 = vunpack.c.l.s4 1983009808
        %v1370 = vunpack.c.0.s8 %v1369
        %v1371 = vlaneseq
        %v1372 = vshrl.u32 %v1371, 7
        %v1373 = vsub.s32 %v1370, %v1372
        %v1374 = vrot.slane %v1367, %v1373
        %v1375 = vcombine.low %v860, %v861
        %v1377 = vunpack.c.l.s4 1983009808
        %v1378 = vunpack.c.0.s8 %v1377
        %v1379 = vlaneseq
        %v1380 = vshrl.u32 %v1379, 7
        %v1381 = vsub.s32 %v1378, %v1380
        %v1382 = vrot.slane %v1375, %v1381
        %v1383 = vcombine.low %v852, %v859
        %v1385 = vunpack.c.l.s4 1983009808
        %v1386 = vunpack.c.0.s8 %v1385
        %v1387 = vlaneseq
        %v1388 = vshrl.u32 %v1387, 7
        %v1389 = vsub.s32 %v1386, %v1388
        %v1390 = vrot.slane %v1383, %v1389
        %v1391 = vcombine.low %v862, %v863
        %v1393 = vunpack.c.l.s4 1983009808
        %v1394 = vunpack.c.0.s8 %v1393
        %v1395 = vlaneseq
        %v1396 = vshrl.u32 %v1395, 7
        %v1397 = vsub.s32 %v1394, %v1396
        %v1398 = vrot.slane %v1391, %v1397
        %v1399 = vcombine.low %v1374, %v1382
        %v1400 = vcombine.high %v1374, %v1382
        %v1402 = vunpack.c.l.s4 1934713408
        %v1403 = vunpack.c.0.s8 %v1402
        %v1404 = vlaneseq
        %v1405 = vshrl.u32 %v1404, 7
        %v1406 = vsub.s32 %v1403, %v1405
        %v1407 = vrot.slane %v1399, %v1406
        %v1409 = vunpack.c.l.s4 1934713408
        %v1410 = vunpack.c.0.s8 %v1409
        %v1411 = vlaneseq
        %v1412 = vshrl.u32 %v1411, 7
        %v1413 = vsub.s32 %v1410, %v1412
        %v1414 = vrot.slane %v1400, %v1413
        %v1415 = vcombine.low %v1390, %v1398
        %v1416 = vcombine.high %v1390, %v1398
        %v1418 = vunpack.c.l.s4 1934713408
        %v1419 = vunpack.c.0.s8 %v1418
        %v1420 = vlaneseq
        %v1421 = vshrl.u32 %v1420, 7
        %v1422 = vsub.s32 %v1419, %v1421
        %v1423 = vrot.slane %v1415, %v1422
        %v1425 = vunpack.c.l.s4 1934713408
        %v1426 = vunpack.c.0.s8 %v1425
        %v1427 = vlaneseq
        %v1428 = vshrl.u32 %v1427, 7
        %v1429 = vsub.s32 %v1426, %v1428
        %v1430 = vrot.slane %v1416, %v1429
        %v1431 = vcombine.low %v1407, %v1423
        %v1432 = vcombine.high %v1407, %v1423
        %v1433 = vcombine.low %v1414, %v1430
        %v1434 = vcombine.high %v1414, %v1430
        %v1435 = vpack.c.bf16 %v1431, %v1431
        %v1436 = vpack.c.bf16 %v1432, %v1432
        %v1437 = vpack.c.bf16 %v1433, %v1433
        %v1438 = vpack.c.bf16 %v1434, %v1434
        %v1439 = vld [vmem:[#allocation14] sm:$0xff]
        %vm1440 = vcmask 64512
        %v1442 = vsel %vm1440, %v1291, 0
        %v1445 = vsel %vm1440, %v1363, 0
        %1447 = vmatprep.subr.bf16.mxu0 0
        %1448 = vmatpush1.bf16.xpose.msra.mxu0 0
        %1449 = vmatprep.subr.bf16.mxu0 0
        %1450 = vmatpush1.bf16.xpose.msra.mxu0 0
        %1451 = vmatprep.subr.bf16.mxu0 0
        %1452 = vmatpush1.bf16.xpose.msra.mxu0 0
        %1453 = vmatprep.subr.bf16.mxu0 0
        %1454 = vmatpush1.bf16.xpose.msra.mxu0 0
        %1455 = vmatprep.subr.bf16.mxu0 0
        %1456 = vmatpush1.bf16.xpose.msra.mxu0 0
        %1457 = vmatprep.subr.bf16.mxu0 0
        %1458 = vmatpush1.bf16.xpose.msra.mxu0 0
        %1459 = vmatprep.subr.bf16.mxu0 0
        %1460 = vmatpush1.bf16.xpose.msra.mxu0 0
        %1461 = vmatprep.subr.bf16.mxu0 0
        %1462 = vmatpush1.bf16.xpose.msra.mxu0 %v1445
        %1463 = vmatprep.subr.bf16.mxu0 0
        %1464 = vmatpush2.bf16.xpose.msra.mxu0 0
        %1465 = vmatprep.subr.bf16.mxu0 0
        %1466 = vmatpush2.bf16.xpose.msra.mxu0 0
        %1467 = vmatprep.subr.bf16.mxu0 0
        %1468 = vmatpush2.bf16.xpose.msra.mxu0 0
        %1469 = vmatprep.subr.bf16.mxu0 0
        %1470 = vmatpush2.bf16.xpose.msra.mxu0 0
        %1471 = vmatprep.subr.bf16.mxu0 0
        %1472 = vmatpush2.bf16.xpose.msra.mxu0 0
        %1473 = vmatprep.subr.bf16.mxu0 0
        %1474 = vmatpush2.bf16.xpose.msra.mxu0 0
        %1475 = vmatprep.subr.bf16.mxu0 0
        %1476 = vmatpush2.bf16.xpose.msra.mxu0 0
        %1477 = vmatprep.subr.bf16.mxu0 0
        %1478 = vmatpush2.bf16.xpose.msra.mxu0 0
        %1479 = vmatprep.mubr.bf16.mxu0 0
        %1480 = vmatmul.mubr.bf16.gmra.mxu0 %v1442
        %v1481 = vpop.f32.mrf.mxu0
        %v1482 = vadd.f32 %v1439, %v1481
        %v1483 = vpop.f32.mrf.mxu0
        %v1484 = vpop.f32.mrf.mxu0
        %v1485 = vpop.f32.mrf.mxu0
        %1486 = vdwg.mxu0
        %v1488 = vsel %vm1440, %v1292, 0
        %v1491 = vsel %vm1440, %v1364, 0
        %1493 = vmatprep.subr.bf16.mxu0 0
        %1494 = vmatpush1.bf16.xpose.msra.mxu0 0
        %1495 = vmatprep.subr.bf16.mxu0 0
        %1496 = vmatpush1.bf16.xpose.msra.mxu0 0
        %1497 = vmatprep.subr.bf16.mxu0 0
        %1498 = vmatpush1.bf16.xpose.msra.mxu0 0
        %1499 = vmatprep.subr.bf16.mxu0 0
        %1500 = vmatpush1.bf16.xpose.msra.mxu0 0
        %1501 = vmatprep.subr.bf16.mxu0 0
        %1502 = vmatpush1.bf16.xpose.msra.mxu0 0
        %1503 = vmatprep.subr.bf16.mxu0 0
        %1504 = vmatpush1.bf16.xpose.msra.mxu0 0
        %1505 = vmatprep.subr.bf16.mxu0 0
        %1506 = vmatpush1.bf16.xpose.msra.mxu0 0
        %1507 = vmatprep.subr.bf16.mxu0 0
        %1508 = vmatpush1.bf16.xpose.msra.mxu0 %v1491
        %1509 = vmatprep.subr.bf16.mxu0 0
        %1510 = vmatpush2.bf16.xpose.msra.mxu0 0
        %1511 = vmatprep.subr.bf16.mxu0 0
        %1512 = vmatpush2.bf16.xpose.msra.mxu0 0
        %1513 = vmatprep.subr.bf16.mxu0 0
        %1514 = vmatpush2.bf16.xpose.msra.mxu0 0
        %1515 = vmatprep.subr.bf16.mxu0 0
        %1516 = vmatpush2.bf16.xpose.msra.mxu0 0
        %1517 = vmatprep.subr.bf16.mxu0 0
        %1518 = vmatpush2.bf16.xpose.msra.mxu0 0
        %1519 = vmatprep.subr.bf16.mxu0 0
        %1520 = vmatpush2.bf16.xpose.msra.mxu0 0
        %1521 = vmatprep.subr.bf16.mxu0 0
        %1522 = vmatpush2.bf16.xpose.msra.mxu0 0
        %1523 = vmatprep.subr.bf16.mxu0 0
        %1524 = vmatpush2.bf16.xpose.msra.mxu0 0
        %1525 = vmatprep.mubr.bf16.mxu0 0
        %1526 = vmatmul.mubr.bf16.gmra.mxu0 %v1488
        %v1527 = vpop.f32.mrf.mxu0
        %v1528 = vadd.f32 %v1439, %v1527
        %v1529 = vpop.f32.mrf.mxu0
        %v1530 = vpop.f32.mrf.mxu0
        %v1531 = vpop.f32.mrf.mxu0
        %1532 = vdwg.mxu0
        %v1534 = vsel %vm1440, %v1293, 0
        %v1537 = vsel %vm1440, %v1365, 0
        %1539 = vmatprep.subr.bf16.mxu0 0
        %1540 = vmatpush1.bf16.xpose.msra.mxu0 0
        %1541 = vmatprep.subr.bf16.mxu0 0
        %1542 = vmatpush1.bf16.xpose.msra.mxu0 0
        %1543 = vmatprep.subr.bf16.mxu0 0
        %1544 = vmatpush1.bf16.xpose.msra.mxu0 0
        %1545 = vmatprep.subr.bf16.mxu0 0
        %1546 = vmatpush1.bf16.xpose.msra.mxu0 0
        %1547 = vmatprep.subr.bf16.mxu0 0
        %1548 = vmatpush1.bf16.xpose.msra.mxu0 0
        %1549 = vmatprep.subr.bf16.mxu0 0
        %1550 = vmatpush1.bf16.xpose.msra.mxu0 0
        %1551 = vmatprep.subr.bf16.mxu0 0
        %1552 = vmatpush1.bf16.xpose.msra.mxu0 0
        %1553 = vmatprep.subr.bf16.mxu0 0
        %1554 = vmatpush1.bf16.xpose.msra.mxu0 %v1537
        %1555 = vmatprep.subr.bf16.mxu0 0
        %1556 = vmatpush2.bf16.xpose.msra.mxu0 0
        %1557 = vmatprep.subr.bf16.mxu0 0
        %1558 = vmatpush2.bf16.xpose.msra.mxu0 0
        %1559 = vmatprep.subr.bf16.mxu0 0
        %1560 = vmatpush2.bf16.xpose.msra.mxu0 0
        %1561 = vmatprep.subr.bf16.mxu0 0
        %1562 = vmatpush2.bf16.xpose.msra.mxu0 0
        %1563 = vmatprep.subr.bf16.mxu0 0
        %1564 = vmatpush2.bf16.xpose.msra.mxu0 0
        %1565 = vmatprep.subr.bf16.mxu0 0
        %1566 = vmatpush2.bf16.xpose.msra.mxu0 0
        %1567 = vmatprep.subr.bf16.mxu0 0
        %1568 = vmatpush2.bf16.xpose.msra.mxu0 0
        %1569 = vmatprep.subr.bf16.mxu0 0
        %1570 = vmatpush2.bf16.xpose.msra.mxu0 0
        %1571 = vmatprep.mubr.bf16.mxu0 0
        %1572 = vmatmul.mubr.bf16.gmra.mxu0 %v1534
        %v1573 = vpop.f32.mrf.mxu0
        %v1574 = vadd.f32 %v1439, %v1573
        %v1575 = vpop.f32.mrf.mxu0
        %v1576 = vpop.f32.mrf.mxu0
        %v1577 = vpop.f32.mrf.mxu0
        %1578 = vdwg.mxu0
        %v1580 = vsel %vm1440, %v1294, 0
        %v1583 = vsel %vm1440, %v1366, 0
        %1585 = vmatprep.subr.bf16.mxu0 0
        %1586 = vmatpush1.bf16.xpose.msra.mxu0 0
        %1587 = vmatprep.subr.bf16.mxu0 0
        %1588 = vmatpush1.bf16.xpose.msra.mxu0 0
        %1589 = vmatprep.subr.bf16.mxu0 0
        %1590 = vmatpush1.bf16.xpose.msra.mxu0 0
        %1591 = vmatprep.subr.bf16.mxu0 0
        %1592 = vmatpush1.bf16.xpose.msra.mxu0 0
        %1593 = vmatprep.subr.bf16.mxu0 0
        %1594 = vmatpush1.bf16.xpose.msra.mxu0 0
        %1595 = vmatprep.subr.bf16.mxu0 0
        %1596 = vmatpush1.bf16.xpose.msra.mxu0 0
        %1597 = vmatprep.subr.bf16.mxu0 0
        %1598 = vmatpush1.bf16.xpose.msra.mxu0 0
        %1599 = vmatprep.subr.bf16.mxu0 0
        %1600 = vmatpush1.bf16.xpose.msra.mxu0 %v1583
        %1601 = vmatprep.subr.bf16.mxu0 0
        %1602 = vmatpush2.bf16.xpose.msra.mxu0 0
        %1603 = vmatprep.subr.bf16.mxu0 0
        %1604 = vmatpush2.bf16.xpose.msra.mxu0 0
        %1605 = vmatprep.subr.bf16.mxu0 0
        %1606 = vmatpush2.bf16.xpose.msra.mxu0 0
        %1607 = vmatprep.subr.bf16.mxu0 0
        %1608 = vmatpush2.bf16.xpose.msra.mxu0 0
        %1609 = vmatprep.subr.bf16.mxu0 0
        %1610 = vmatpush2.bf16.xpose.msra.mxu0 0
        %1611 = vmatprep.subr.bf16.mxu0 0
        %1612 = vmatpush2.bf16.xpose.msra.mxu0 0
        %1613 = vmatprep.subr.bf16.mxu0 0
        %1614 = vmatpush2.bf16.xpose.msra.mxu0 0
        %1615 = vmatprep.subr.bf16.mxu0 0
        %1616 = vmatpush2.bf16.xpose.msra.mxu0 0
        %1617 = vmatprep.mubr.bf16.mxu0 0
        %1618 = vmatmul.mubr.bf16.gmra.mxu0 %v1580
        %v1619 = vpop.f32.mrf.mxu0
        %v1620 = vadd.f32 %v1439, %v1619
        %v1621 = vpop.f32.mrf.mxu0
        %v1622 = vpop.f32.mrf.mxu0
        %v1623 = vpop.f32.mrf.mxu0
        %1624 = vdwg.mxu0
        %v1625 = vsel %vm1440, %v1482, -inf
        %1626 = vmax.xlane.f32.xlu0 %v1625
        %v1627 = vpop.xlane.xlu0 %1626
        %v1628 = vsel %vm1440, %v1528, -inf
        %1629 = vmax.xlane.f32.xlu0 %v1628
        %v1630 = vpop.xlane.xlu0 %1629
        %v1631 = vsel %vm1440, %v1574, -inf
        %1632 = vmax.xlane.f32.xlu0 %v1631
        %v1633 = vpop.xlane.xlu0 %1632
        %v1634 = vsel %vm1440, %v1620, -inf
        %1635 = vmax.xlane.f32.xlu0 %v1634
        %v1636 = vpop.xlane.xlu0 %1635
        %v1637 = vsub.f32 %v1482, %v1627
        %v1638 = vsub.f32 %v1528, %v1630
        %v1639 = vsub.f32 %v1574, %v1633
        %v1640 = vsub.f32 %v1620, %v1636
        %v1641 = vmul.f32 %v1637, 1.442695
        %v1642 = vpow.pop %v1641
        %v1643 = vmul.f32 %v1638, 1.442695
        %v1644 = vpow.pop %v1643
        %v1645 = vmul.f32 %v1639, 1.442695
        %v1646 = vpow.pop %v1645
        %v1647 = vmul.f32 %v1640, 1.442695
        %v1648 = vpow.pop %v1647
        %v1649 = vsel %vm1440, %v1642, 0.0
        %1650 = vadd.xlane.f32.xlu0 %v1649
        %v1651 = vpop.xlane.xlu0 %1650
        %v1652 = vsel %vm1440, %v1644, 0.0
        %1653 = vadd.xlane.f32.xlu0 %v1652
        %v1654 = vpop.xlane.xlu0 %1653
        %v1655 = vsel %vm1440, %v1646, 0.0
        %1656 = vadd.xlane.f32.xlu0 %v1655
        %v1657 = vpop.xlane.xlu0 %1656
        %v1658 = vsel %vm1440, %v1648, 0.0
        %1659 = vadd.xlane.f32.xlu0 %v1658
        %v1660 = vpop.xlane.xlu0 %1659
        %v1661 = vpack.c.bf16 %v1642, %v1642
        %v1662 = vpack.c.bf16 %v1644, %v1644
        %v1663 = vpack.c.bf16 %v1646, %v1646
        %v1664 = vpack.c.bf16 %v1648, %v1648
        %v1666 = vsel %vm1440, %v1661, 0
        %vm1668 = vcmask 1043456
        %v1670 = vsel %vm1668, %v1435, 0
        %1672 = vmatprep.subr.bf16.mxu0 0
        %1673 = vmatpush1.bf16.msra.mxu0 0
        %1674 = vmatprep.subr.bf16.mxu0 0
        %1675 = vmatpush1.bf16.msra.mxu0 0
        %1676 = vmatprep.subr.bf16.mxu0 0
        %1677 = vmatpush1.bf16.msra.mxu0 0
        %1678 = vmatprep.subr.bf16.mxu0 0
        %1679 = vmatpush1.bf16.msra.mxu0 0
        %1680 = vmatprep.subr.bf16.mxu0 0
        %1681 = vmatpush1.bf16.msra.mxu0 0
        %1682 = vmatprep.subr.bf16.mxu0 0
        %1683 = vmatpush1.bf16.msra.mxu0 0
        %1684 = vmatprep.subr.bf16.mxu0 0
        %1685 = vmatpush1.bf16.msra.mxu0 0
        %1686 = vmatprep.subr.bf16.mxu0 0
        %1687 = vmatpush1.bf16.msra.mxu0 %v1670
        %1688 = vmatprep.subr.bf16.mxu0 0
        %1689 = vmatpush2.bf16.msra.mxu0 0
        %1690 = vmatprep.subr.bf16.mxu0 0
        %1691 = vmatpush2.bf16.msra.mxu0 0
        %1692 = vmatprep.subr.bf16.mxu0 0
        %1693 = vmatpush2.bf16.msra.mxu0 0
        %1694 = vmatprep.subr.bf16.mxu0 0
        %1695 = vmatpush2.bf16.msra.mxu0 0
        %1696 = vmatprep.subr.bf16.mxu0 0
        %1697 = vmatpush2.bf16.msra.mxu0 0
        %1698 = vmatprep.subr.bf16.mxu0 0
        %1699 = vmatpush2.bf16.msra.mxu0 0
        %1700 = vmatprep.subr.bf16.mxu0 0
        %1701 = vmatpush2.bf16.msra.mxu0 0
        %1702 = vmatprep.subr.bf16.mxu0 0
        %1703 = vmatpush2.bf16.msra.mxu0 0
        %1704 = vmatprep.mubr.bf16.mxu0 0
        %1705 = vmatmul.mubr.bf16.gmra.mxu0 %v1666
        %v1706 = vpop.f32.mrf.mxu0
        %v1707 = vadd.f32 0.0, %v1706
        %v1708 = vpop.f32.mrf.mxu0
        %v1709 = vpop.f32.mrf.mxu0
        %v1710 = vpop.f32.mrf.mxu0
        %1711 = vdwg.mxu0
        %v1713 = vsel %vm1440, %v1662, 0
        %v1716 = vsel %vm1668, %v1436, 0
        %1718 = vmatprep.subr.bf16.mxu0 0
        %1719 = vmatpush1.bf16.msra.mxu0 0
        %1720 = vmatprep.subr.bf16.mxu0 0
        %1721 = vmatpush1.bf16.msra.mxu0 0
        %1722 = vmatprep.subr.bf16.mxu0 0
        %1723 = vmatpush1.bf16.msra.mxu0 0
        %1724 = vmatprep.subr.bf16.mxu0 0
        %1725 = vmatpush1.bf16.msra.mxu0 0
        %1726 = vmatprep.subr.bf16.mxu0 0
        %1727 = vmatpush1.bf16.msra.mxu0 0
        %1728 = vmatprep.subr.bf16.mxu0 0
        %1729 = vmatpush1.bf16.msra.mxu0 0
        %1730 = vmatprep.subr.bf16.mxu0 0
        %1731 = vmatpush1.bf16.msra.mxu0 0
        %1732 = vmatprep.subr.bf16.mxu0 0
        %1733 = vmatpush1.bf16.msra.mxu0 %v1716
        %1734 = vmatprep.subr.bf16.mxu0 0
        %1735 = vmatpush2.bf16.msra.mxu0 0
        %1736 = vmatprep.subr.bf16.mxu0 0
        %1737 = vmatpush2.bf16.msra.mxu0 0
        %1738 = vmatprep.subr.bf16.mxu0 0
        %1739 = vmatpush2.bf16.msra.mxu0 0
        %1740 = vmatprep.subr.bf16.mxu0 0
        %1741 = vmatpush2.bf16.msra.mxu0 0
        %1742 = vmatprep.subr.bf16.mxu0 0
        %1743 = vmatpush2.bf16.msra.mxu0 0
        %1744 = vmatprep.subr.bf16.mxu0 0
        %1745 = vmatpush2.bf16.msra.mxu0 0
        %1746 = vmatprep.subr.bf16.mxu0 0
        %1747 = vmatpush2.bf16.msra.mxu0 0
        %1748 = vmatprep.subr.bf16.mxu0 0
        %1749 = vmatpush2.bf16.msra.mxu0 0
        %1750 = vmatprep.mubr.bf16.mxu0 0
        %1751 = vmatmul.mubr.bf16.gmra.mxu0 %v1713
        %v1752 = vpop.f32.mrf.mxu0
        %v1753 = vadd.f32 0.0, %v1752
        %v1754 = vpop.f32.mrf.mxu0
        %v1755 = vpop.f32.mrf.mxu0
        %v1756 = vpop.f32.mrf.mxu0
        %1757 = vdwg.mxu0
        %v1759 = vsel %vm1440, %v1663, 0
        %v1762 = vsel %vm1668, %v1437, 0
        %1764 = vmatprep.subr.bf16.mxu0 0
        %1765 = vmatpush1.bf16.msra.mxu0 0
        %1766 = vmatprep.subr.bf16.mxu0 0
        %1767 = vmatpush1.bf16.msra.mxu0 0
        %1768 = vmatprep.subr.bf16.mxu0 0
        %1769 = vmatpush1.bf16.msra.mxu0 0
        %1770 = vmatprep.subr.bf16.mxu0 0
        %1771 = vmatpush1.bf16.msra.mxu0 0
        %1772 = vmatprep.subr.bf16.mxu0 0
        %1773 = vmatpush1.bf16.msra.mxu0 0
        %1774 = vmatprep.subr.bf16.mxu0 0
        %1775 = vmatpush1.bf16.msra.mxu0 0
        %1776 = vmatprep.subr.bf16.mxu0 0
        %1777 = vmatpush1.bf16.msra.mxu0 0
        %1778 = vmatprep.subr.bf16.mxu0 0
        %1779 = vmatpush1.bf16.msra.mxu0 %v1762
        %1780 = vmatprep.subr.bf16.mxu0 0
        %1781 = vmatpush2.bf16.msra.mxu0 0
        %1782 = vmatprep.subr.bf16.mxu0 0
        %1783 = vmatpush2.bf16.msra.mxu0 0
        %1784 = vmatprep.subr.bf16.mxu0 0
        %1785 = vmatpush2.bf16.msra.mxu0 0
        %1786 = vmatprep.subr.bf16.mxu0 0
        %1787 = vmatpush2.bf16.msra.mxu0 0
        %1788 = vmatprep.subr.bf16.mxu0 0
        %1789 = vmatpush2.bf16.msra.mxu0 0
        %1790 = vmatprep.subr.bf16.mxu0 0
        %1791 = vmatpush2.bf16.msra.mxu0 0
        %1792 = vmatprep.subr.bf16.mxu0 0
        %1793 = vmatpush2.bf16.msra.mxu0 0
        %1794 = vmatprep.subr.bf16.mxu0 0
        %1795 = vmatpush2.bf16.msra.mxu0 0
        %1796 = vmatprep.mubr.bf16.mxu0 0
        %1797 = vmatmul.mubr.bf16.gmra.mxu0 %v1759
        %v1798 = vpop.f32.mrf.mxu0
        %v1799 = vadd.f32 0.0, %v1798
        %v1800 = vpop.f32.mrf.mxu0
        %v1801 = vpop.f32.mrf.mxu0
        %v1802 = vpop.f32.mrf.mxu0
        %1803 = vdwg.mxu0
        %v1805 = vsel %vm1440, %v1664, 0
        %v1808 = vsel %vm1668, %v1438, 0
        %1810 = vmatprep.subr.bf16.mxu0 0
        %1811 = vmatpush1.bf16.msra.mxu0 0
        %1812 = vmatprep.subr.bf16.mxu0 0
        %1813 = vmatpush1.bf16.msra.mxu0 0
        %1814 = vmatprep.subr.bf16.mxu0 0
        %1815 = vmatpush1.bf16.msra.mxu0 0
        %1816 = vmatprep.subr.bf16.mxu0 0
        %1817 = vmatpush1.bf16.msra.mxu0 0
        %1818 = vmatprep.subr.bf16.mxu0 0
        %1819 = vmatpush1.bf16.msra.mxu0 0
        %1820 = vmatprep.subr.bf16.mxu0 0
        %1821 = vmatpush1.bf16.msra.mxu0 0
        %1822 = vmatprep.subr.bf16.mxu0 0
        %1823 = vmatpush1.bf16.msra.mxu0 0
        %1824 = vmatprep.subr.bf16.mxu0 0
        %1825 = vmatpush1.bf16.msra.mxu0 %v1808
        %1826 = vmatprep.subr.bf16.mxu0 0
        %1827 = vmatpush2.bf16.msra.mxu0 0
        %1828 = vmatprep.subr.bf16.mxu0 0
        %1829 = vmatpush2.bf16.msra.mxu0 0
        %1830 = vmatprep.subr.bf16.mxu0 0
        %1831 = vmatpush2.bf16.msra.mxu0 0
        %1832 = vmatprep.subr.bf16.mxu0 0
        %1833 = vmatpush2.bf16.msra.mxu0 0
        %1834 = vmatprep.subr.bf16.mxu0 0
        %1835 = vmatpush2.bf16.msra.mxu0 0
        %1836 = vmatprep.subr.bf16.mxu0 0
        %1837 = vmatpush2.bf16.msra.mxu0 0
        %1838 = vmatprep.subr.bf16.mxu0 0
        %1839 = vmatpush2.bf16.msra.mxu0 0
        %1840 = vmatprep.subr.bf16.mxu0 0
        %1841 = vmatpush2.bf16.msra.mxu0 0
        %1842 = vmatprep.mubr.bf16.mxu0 0
        %1843 = vmatmul.mubr.bf16.gmra.mxu0 %v1805
        %v1844 = vpop.f32.mrf.mxu0
        %v1845 = vadd.f32 0.0, %v1844
        %v1846 = vpop.f32.mrf.mxu0
        %v1847 = vpop.f32.mrf.mxu0
        %v1848 = vpop.f32.mrf.mxu0
        %1849 = vdwg.mxu0
        %v1850 = vrcp.pop %v1651
        %v1851 = vrcp.pop %v1654
        %v1852 = vrcp.pop %v1657
        %v1853 = vrcp.pop %v1660
        %v1854 = vmul.f32 %v1707, %v1850
        %v1855 = vmul.f32 %v1753, %v1851
        %v1856 = vmul.f32 %v1799, %v1852
        %v1857 = vmul.f32 %v1845, %v1853
        %v1858 = vcombine.low %v1854, %v1856
        %v1859 = vcombine.high %v1854, %v1856
        %v1861 = vunpack.c.l.s4 1983009808
        %v1862 = vunpack.c.0.s8 %v1861
        %v1863 = vlaneseq
        %v1864 = vshrl.u32 %v1863, 7
        %v1865 = vsub.s32 %v1862, %v1864
        %v1866 = vrot.slane %v1858, %v1865
        %v1868 = vunpack.c.l.s4 1983009808
        %v1869 = vunpack.c.0.s8 %v1868
        %v1870 = vlaneseq
        %v1871 = vshrl.u32 %v1870, 7
        %v1872 = vsub.s32 %v1869, %v1871
        %v1873 = vrot.slane %v1859, %v1872
        %v1874 = vcombine.low %v1855, %v1857
        %v1875 = vcombine.high %v1855, %v1857
        %v1877 = vunpack.c.l.s4 1983009808
        %v1878 = vunpack.c.0.s8 %v1877
        %v1879 = vlaneseq
        %v1880 = vshrl.u32 %v1879, 7
        %v1881 = vsub.s32 %v1878, %v1880
        %v1882 = vrot.slane %v1874, %v1881
        %v1884 = vunpack.c.l.s4 1983009808
        %v1885 = vunpack.c.0.s8 %v1884
        %v1886 = vlaneseq
        %v1887 = vshrl.u32 %v1886, 7
        %v1888 = vsub.s32 %v1885, %v1887
        %v1889 = vrot.slane %v1875, %v1888
        %v1890 = vcombine.low %v1866, %v1882
        %v1891 = vcombine.high %v1866, %v1882
        %v1893 = vunpack.c.l.s4 1934713408
        %v1894 = vunpack.c.0.s8 %v1893
        %v1895 = vlaneseq
        %v1896 = vshrl.u32 %v1895, 7
        %v1897 = vsub.s32 %v1894, %v1896
        %v1898 = vrot.slane %v1890, %v1897
        %v1900 = vunpack.c.l.s4 1934713408
        %v1901 = vunpack.c.0.s8 %v1900
        %v1902 = vlaneseq
        %v1903 = vshrl.u32 %v1902, 7
        %v1904 = vsub.s32 %v1901, %v1903
        %v1905 = vrot.slane %v1891, %v1904
        %v1906 = vcombine.low %v1873, %v1889
        %v1907 = vcombine.high %v1873, %v1889
        %v1909 = vunpack.c.l.s4 1934713408
        %v1910 = vunpack.c.0.s8 %v1909
        %v1911 = vlaneseq
        %v1912 = vshrl.u32 %v1911, 7
        %v1913 = vsub.s32 %v1910, %v1912
        %v1914 = vrot.slane %v1906, %v1913
        %v1916 = vunpack.c.l.s4 1934713408
        %v1917 = vunpack.c.0.s8 %v1916
        %v1918 = vlaneseq
        %v1919 = vshrl.u32 %v1918, 7
        %v1920 = vsub.s32 %v1917, %v1919
        %v1921 = vrot.slane %v1907, %v1920
        %v1922 = vcombine.high %v1898, 0.0
        %v1923 = vcombine.high %v1905, 0.0
        %v1924 = vcombine.high %v1914, 0.0
        %v1925 = vcombine.high %v1921, 0.0
        %v1926 = vcombine.low %v1898, %v1905
        %v1928 = vunpack.c.l.s4 1983009808
        %v1929 = vunpack.c.0.s8 %v1928
        %v1930 = vlaneseq
        %v1931 = vshrl.u32 %v1930, 7
        %v1932 = vsub.s32 %v1929, %v1931
        %v1933 = vrot.slane %v1926, %v1932
        %v1934 = vcombine.low %v1922, %v1923
        %v1936 = vunpack.c.l.s4 1983009808
        %v1937 = vunpack.c.0.s8 %v1936
        %v1938 = vlaneseq
        %v1939 = vshrl.u32 %v1938, 7
        %v1940 = vsub.s32 %v1937, %v1939
        %v1941 = vrot.slane %v1934, %v1940
        %v1942 = vcombine.low %v1914, %v1921
        %v1944 = vunpack.c.l.s4 1983009808
        %v1945 = vunpack.c.0.s8 %v1944
        %v1946 = vlaneseq
        %v1947 = vshrl.u32 %v1946, 7
        %v1948 = vsub.s32 %v1945, %v1947
        %v1949 = vrot.slane %v1942, %v1948
        %v1950 = vcombine.low %v1924, %v1925
        %v1952 = vunpack.c.l.s4 1983009808
        %v1953 = vunpack.c.0.s8 %v1952
        %v1954 = vlaneseq
        %v1955 = vshrl.u32 %v1954, 7
        %v1956 = vsub.s32 %v1953, %v1955
        %v1957 = vrot.slane %v1950, %v1956
        %v1958 = vcombine.low %v1933, %v1941
        %v1959 = vcombine.high %v1933, %v1941
        %v1961 = vunpack.c.l.s4 1934713408
        %v1962 = vunpack.c.0.s8 %v1961
        %v1963 = vlaneseq
        %v1964 = vshrl.u32 %v1963, 7
        %v1965 = vsub.s32 %v1962, %v1964
        %v1966 = vrot.slane %v1958, %v1965
        %v1968 = vunpack.c.l.s4 1934713408
        %v1969 = vunpack.c.0.s8 %v1968
        %v1970 = vlaneseq
        %v1971 = vshrl.u32 %v1970, 7
        %v1972 = vsub.s32 %v1969, %v1971
        %v1973 = vrot.slane %v1959, %v1972
        %v1974 = vcombine.low %v1949, %v1957
        %v1975 = vcombine.high %v1949, %v1957
        %v1977 = vunpack.c.l.s4 1934713408
        %v1978 = vunpack.c.0.s8 %v1977
        %v1979 = vlaneseq
        %v1980 = vshrl.u32 %v1979, 7
        %v1981 = vsub.s32 %v1978, %v1980
        %v1982 = vrot.slane %v1974, %v1981
        %v1984 = vunpack.c.l.s4 1934713408
        %v1985 = vunpack.c.0.s8 %v1984
        %v1986 = vlaneseq
        %v1987 = vshrl.u32 %v1986, 7
        %v1988 = vsub.s32 %v1985, %v1987
        %v1989 = vrot.slane %v1975, %v1988
        %v1990 = vcombine.low %v1966, %v1982
        %v1991 = vcombine.high %v1966, %v1982
        %v1992 = vcombine.low %v1973, %v1989
        %v1993 = vcombine.high %v1973, %v1989
        %1995 = vrot.lane.b32.xlu0 %v1991, 8
        %v1996 = vpop.permute.xlu0 %1995
        %1999 = vrot.lane.b32.xlu0 %v1992, 16
        %v2000 = vpop.permute.xlu0 %1999
        %2003 = vrot.lane.b32.xlu0 %v1993, 24
        %v2004 = vpop.permute.xlu0 %2003
        %v2006 = vsel %vm1440, %v1990, %v1996
        %vm2007 = vcmask 130048
        %v2008 = vsel %vm2007, %v2006, %v2000
        %vm2009 = vcmask 195584
        %v2010 = vsel %vm2009, %v2008, %v2004
        %v2011 = vpack.c.bf16 %v2010, %v2010
        %v2012 = vld [vmem:[%s4] sm:$0xf]
        %v2013 = vld [vmem:[%s4 + $0x4] sm:$0xf]
        %v2014 = vld [vmem:[%s4 + $0x8] sm:$0xf]
        %v2015 = vld [vmem:[%s4 + $0xc] sm:$0xf]
        %v2016 = vld [vmem:[#allocation7] sm:$0x1]
        %v2018 = vlaneseq
        %v2019 = vshrl.u32 %v2018, 7
        %v2020 = vsub.s32 0, %v2019
        %v2021 = vrot.slane %v2016, %v2020
        %v2027 = vunpack.c.l.b16 %v2012
        %v2028 = vunpack.c.l.b16 %v2013
        %v2029 = vunpack.c.l.b16 %v2014
        %v2030 = vunpack.c.l.b16 %v2015
        %v2031 = vpack.c.b16 %v2028, %v2027
        %v2032 = vpack.c.b16 %v2030, %v2029
        %v2036 = vsel %vm542, %v2011, 0
        %2038 = vmatprep.subr.bf16.mxu0 0
        %2039 = vmatpush1.bf16.msra.mxu0 0
        %2040 = vmatprep.subr.bf16.mxu0 0
        %2041 = vmatpush1.bf16.msra.mxu0 0
        %2042 = vmatprep.subr.bf16.mxu0 0
        %2043 = vmatpush1.bf16.msra.mxu0 0
        %2044 = vmatprep.subr.bf16.mxu0 0
        %2045 = vmatpush1.bf16.msra.mxu0 0
        %2046 = vmatprep.subr.bf16.mxu0 0
        %2047 = vmatpush1.bf16.msra.mxu0 0
        %2048 = vmatprep.subr.bf16.mxu0 0
        %2049 = vmatpush1.bf16.msra.mxu0 0
        %2050 = vmatprep.subr.bf16.mxu0 0
        %2051 = vmatpush1.bf16.msra.mxu0 %v2032
        %2052 = vmatprep.subr.bf16.mxu0 0
        %2053 = vmatpush1.bf16.msra.mxu0 %v2031
        %2054 = vmatprep.subr.bf16.mxu0 0
        %2055 = vmatpush2.bf16.msra.mxu0 0
        %2056 = vmatprep.subr.bf16.mxu0 0
        %2057 = vmatpush2.bf16.msra.mxu0 0
        %2058 = vmatprep.subr.bf16.mxu0 0
        %2059 = vmatpush2.bf16.msra.mxu0 0
        %2060 = vmatprep.subr.bf16.mxu0 0
        %2061 = vmatpush2.bf16.msra.mxu0 0
        %2062 = vmatprep.subr.bf16.mxu0 0
        %2063 = vmatpush2.bf16.msra.mxu0 0
        %2064 = vmatprep.subr.bf16.mxu0 0
        %2065 = vmatpush2.bf16.msra.mxu0 0
        %2066 = vmatprep.subr.bf16.mxu0 0
        %2067 = vmatpush2.bf16.msra.mxu0 0
        %2068 = vmatprep.subr.bf16.mxu0 0
        %2069 = vmatpush2.bf16.msra.mxu0 0
        %2070 = vmatprep.mubr.bf16.mxu0 0
        %2071 = vmatmul.mubr.bf16.gmra.mxu0 %v2036
        %v2072 = vpop.f32.mrf.mxu0
        %v2073 = vadd.f32 %v2021, %v2072
        %v2074 = vpop.f32.mrf.mxu0
        %v2075 = vpop.f32.mrf.mxu0
        %v2076 = vpop.f32.mrf.mxu0
        %2077 = vdwg.mxu0
        %v2078 = vadd.f32 %v540, %v2073
        %v2079 = vmul.f32 %v2078, %v2078
        %v2080 = vsel %vm542, %v2079, 0.0
        %2081 = vadd.xlane.f32.xlu0 %v2080
        %v2082 = vpop.xlane.xlu0 %2081
        %v2083 = vmul.f32 %v2082, %v546
        %v2084 = vadd.f32 %v2083, 1e-06
        %v2085 = vrsqrt.pop %v2084
        %v2086 = vmul.f32 %v2078, %v2085
        %v2087 = vld [vmem:[#allocation8] sm:$0x1]
        %v2089 = vlaneseq
        %v2090 = vshrl.u32 %v2089, 7
        %v2091 = vsub.s32 0, %v2090
        %v2092 = vrot.slane %v2087, %v2091
        %v2094 = vmul.f32 %v2086, %v2092
        %v2095 = vpack.c.bf16 %v2094, %v2094
        %v2096 = vld [vmem:[%s7] sm:$0xf]
        %v2097 = vld [vmem:[%s7 + $0x4] sm:$0xf]
        %v2098 = vld [vmem:[%s7 + $0x8] sm:$0xf]
        %v2099 = vld [vmem:[%s7 + $0xc] sm:$0xf]
        %v2104 = vunpack.c.l.b16 %v2096
        %v2105 = vunpack.c.l.b16 %v2097
        %v2106 = vunpack.c.l.b16 %v2098
        %v2107 = vunpack.c.l.b16 %v2099
        %v2108 = vpack.c.b16 %v2105, %v2104
        %v2109 = vpack.c.b16 %v2107, %v2106
        %v2113 = vsel %vm542, %v2095, 0
        %2115 = vmatprep.subr.bf16.mxu0 0
        %2116 = vmatpush1.bf16.msra.mxu0 0
        %2117 = vmatprep.subr.bf16.mxu0 0
        %2118 = vmatpush1.bf16.msra.mxu0 0
        %2119 = vmatprep.subr.bf16.mxu0 0
        %2120 = vmatpush1.bf16.msra.mxu0 0
        %2121 = vmatprep.subr.bf16.mxu0 0
        %2122 = vmatpush1.bf16.msra.mxu0 0
        %2123 = vmatprep.subr.bf16.mxu0 0
        %2124 = vmatpush1.bf16.msra.mxu0 0
        %2125 = vmatprep.subr.bf16.mxu0 0
        %2126 = vmatpush1.bf16.msra.mxu0 0
        %2127 = vmatprep.subr.bf16.mxu0 0
        %2128 = vmatpush1.bf16.msra.mxu0 %v2109
        %2129 = vmatprep.subr.bf16.mxu0 0
        %2130 = vmatpush1.bf16.msra.mxu0 %v2108
        %2131 = vmatprep.subr.bf16.mxu0 0
        %2132 = vmatpush2.bf16.msra.mxu0 0
        %2133 = vmatprep.subr.bf16.mxu0 0
        %2134 = vmatpush2.bf16.msra.mxu0 0
        %2135 = vmatprep.subr.bf16.mxu0 0
        %2136 = vmatpush2.bf16.msra.mxu0 0
        %2137 = vmatprep.subr.bf16.mxu0 0
        %2138 = vmatpush2.bf16.msra.mxu0 0
        %2139 = vmatprep.subr.bf16.mxu0 0
        %2140 = vmatpush2.bf16.msra.mxu0 0
        %2141 = vmatprep.subr.bf16.mxu0 0
        %2142 = vmatpush2.bf16.msra.mxu0 0
        %2143 = vmatprep.subr.bf16.mxu0 0
        %2144 = vmatpush2.bf16.msra.mxu0 0
        %2145 = vmatprep.subr.bf16.mxu0 0
        %2146 = vmatpush2.bf16.msra.mxu0 0
        %2147 = vmatprep.mubr.bf16.mxu0 0
        %2148 = vmatmul.mubr.bf16.gmra.mxu0 %v2113
        %v2149 = vpop.f32.mrf.mxu0
        %v2150 = vadd.f32 0.0, %v2149
        %v2151 = vpop.f32.mrf.mxu0
        %v2152 = vpop.f32.mrf.mxu0
        %v2153 = vpop.f32.mrf.mxu0
        %2154 = vdwg.mxu0
        %v2155 = vld [vmem:[#allocation10] sm:$0xf]
        %v2156 = vld [vmem:[#allocation10 + $0x4] sm:$0xf]
        %v2157 = vld [vmem:[#allocation10 + $0x8] sm:$0xf]
        %v2158 = vld [vmem:[#allocation10 + $0xc] sm:$0xf]
        %v2163 = vunpack.c.l.b16 %v2155
        %v2164 = vunpack.c.l.b16 %v2156
        %v2165 = vunpack.c.l.b16 %v2157
        %v2166 = vunpack.c.l.b16 %v2158
        %v2167 = vpack.c.b16 %v2164, %v2163
        %v2168 = vpack.c.b16 %v2166, %v2165
        %2171 = vmatprep.subr.bf16.mxu0 0
        %2172 = vmatpush1.bf16.msra.mxu0 0
        %2173 = vmatprep.subr.bf16.mxu0 0
        %2174 = vmatpush1.bf16.msra.mxu0 0
        %2175 = vmatprep.subr.bf16.mxu0 0
        %2176 = vmatpush1.bf16.msra.mxu0 0
        %2177 = vmatprep.subr.bf16.mxu0 0
        %2178 = vmatpush1.bf16.msra.mxu0 0
        %2179 = vmatprep.subr.bf16.mxu0 0
        %2180 = vmatpush1.bf16.msra.mxu0 0
        %2181 = vmatprep.subr.bf16.mxu0 0
        %2182 = vmatpush1.bf16.msra.mxu0 0
        %2183 = vmatprep.subr.bf16.mxu0 0
        %2184 = vmatpush1.bf16.msra.mxu0 %v2168
        %2185 = vmatprep.subr.bf16.mxu0 0
        %2186 = vmatpush1.bf16.msra.mxu0 %v2167
        %2187 = vmatprep.subr.bf16.mxu0 0
        %2188 = vmatpush2.bf16.msra.mxu0 0
        %2189 = vmatprep.subr.bf16.mxu0 0
        %2190 = vmatpush2.bf16.msra.mxu0 0
        %2191 = vmatprep.subr.bf16.mxu0 0
        %2192 = vmatpush2.bf16.msra.mxu0 0
        %2193 = vmatprep.subr.bf16.mxu0 0
        %2194 = vmatpush2.bf16.msra.mxu0 0
        %2195 = vmatprep.subr.bf16.mxu0 0
        %2196 = vmatpush2.bf16.msra.mxu0 0
        %2197 = vmatprep.subr.bf16.mxu0 0
        %2198 = vmatpush2.bf16.msra.mxu0 0
        %2199 = vmatprep.subr.bf16.mxu0 0
        %2200 = vmatpush2.bf16.msra.mxu0 0
        %2201 = vmatprep.subr.bf16.mxu0 0
        %2202 = vmatpush2.bf16.msra.mxu0 0
        %2203 = vmatprep.mubr.bf16.mxu0 0
        %2204 = vmatmul.mubr.bf16.gmra.mxu0 %v2113
        %v2205 = vpop.f32.mrf.mxu0
        %v2206 = vadd.f32 0.0, %v2205
        %v2207 = vpop.f32.mrf.mxu0
        %v2208 = vpop.f32.mrf.mxu0
        %v2209 = vpop.f32.mrf.mxu0
        %2210 = vdwg.mxu0
        %v2211 = vxor.u32 %v2150, 2147483648
        %v2212 = vmul.f32 %v2211, 1.442695
        %v2213 = vpow.pop %v2212
        %v2214 = vadd.f32 %v2213, 1.0
        %v2215 = vrcp.pop %v2214
        %v2216 = vmul.f32 1.0, %v2215
        %v2217 = vmul.f32 %v2150, %v2216
        %v2218 = vmul.f32 %v2217, %v2206
        %v2219 = vpack.c.bf16 %v2218, %v2218
        %v2220 = vld [vmem:[%s9] sm:$0xf]
        %v2221 = vld [vmem:[%s9 + $0x4] sm:$0xf]
        %v2222 = vld [vmem:[%s9 + $0x8] sm:$0xf]
        %v2223 = vld [vmem:[%s9 + $0xc] sm:$0xf]
        %v2224 = vld [vmem:[%s9 + $0x10] sm:$0xf]
        %v2225 = vld [vmem:[%s9 + $0x14] sm:$0xf]
        %v2226 = vld [vmem:[%s9 + $0x18] sm:$0xf]
        %v2227 = vld [vmem:[%s9 + $0x1c] sm:$0xf]
        %v2228 = vld [vmem:[%s9 + $0x20] sm:$0xf]
        %v2229 = vld [vmem:[%s9 + $0x24] sm:$0xf]
        %v2230 = vld [vmem:[%s9 + $0x28] sm:$0xf]
        %v2231 = vld [vmem:[%s9 + $0x2c] sm:$0xf]
        %v2244 = vunpack.c.l.b16 %v2220
        %v2245 = vunpack.c.l.b16 %v2221
        %v2246 = vunpack.c.l.b16 %v2222
        %v2247 = vunpack.c.l.b16 %v2223
        %v2248 = vunpack.c.l.b16 %v2224
        %v2249 = vunpack.c.l.b16 %v2225
        %v2250 = vunpack.c.l.b16 %v2226
        %v2251 = vunpack.c.l.b16 %v2227
        %v2252 = vunpack.c.l.b16 %v2228
        %v2253 = vunpack.c.l.b16 %v2229
        %v2254 = vunpack.c.l.b16 %v2230
        %v2255 = vunpack.c.l.b16 %v2231
        %v2256 = vpack.c.b16 %v2245, %v2244
        %v2257 = vpack.c.b16 %v2247, %v2246
        %v2258 = vpack.c.b16 %v2249, %v2248
        %v2259 = vpack.c.b16 %v2251, %v2250
        %v2260 = vpack.c.b16 %v2253, %v2252
        %v2261 = vpack.c.b16 %v2255, %v2254
        %vm2268 = vcmask 785408
        %v2270 = vsel %vm2268, %v2219, 0
        %2272 = vmatprep.subr.bf16.mxu0 0
        %2273 = vmatpush1.bf16.msra.mxu0 0
        %2274 = vmatprep.subr.bf16.mxu0 0
        %2275 = vmatpush1.bf16.msra.mxu0 0
        %2276 = vmatprep.subr.bf16.mxu0 0
        %2277 = vmatpush1.bf16.msra.mxu0 %v2261
        %2278 = vmatprep.subr.bf16.mxu0 0
        %2279 = vmatpush1.bf16.msra.mxu0 %v2260
        %2280 = vmatprep.subr.bf16.mxu0 0
        %2281 = vmatpush1.bf16.msra.mxu0 %v2259
        %2282 = vmatprep.subr.bf16.mxu0 0
        %2283 = vmatpush1.bf16.msra.mxu0 %v2258
        %2284 = vmatprep.subr.bf16.mxu0 0
        %2285 = vmatpush1.bf16.msra.mxu0 %v2257
        %2286 = vmatprep.subr.bf16.mxu0 0
        %2287 = vmatpush1.bf16.msra.mxu0 %v2256
        %2288 = vmatprep.subr.bf16.mxu0 0
        %2289 = vmatpush2.bf16.msra.mxu0 0
        %2290 = vmatprep.subr.bf16.mxu0 0
        %2291 = vmatpush2.bf16.msra.mxu0 0
        %2292 = vmatprep.subr.bf16.mxu0 0
        %2293 = vmatpush2.bf16.msra.mxu0 0
        %2294 = vmatprep.subr.bf16.mxu0 0
        %2295 = vmatpush2.bf16.msra.mxu0 0
        %2296 = vmatprep.subr.bf16.mxu0 0
        %2297 = vmatpush2.bf16.msra.mxu0 0
        %2298 = vmatprep.subr.bf16.mxu0 0
        %2299 = vmatpush2.bf16.msra.mxu0 0
        %2300 = vmatprep.subr.bf16.mxu0 0
        %2301 = vmatpush2.bf16.msra.mxu0 0
        %2302 = vmatprep.subr.bf16.mxu0 0
        %2303 = vmatpush2.bf16.msra.mxu0 0
        %2304 = vmatprep.mubr.bf16.mxu0 0
        %2305 = vmatmul.mubr.bf16.gmra.mxu0 %v2270
        %v2306 = vpop.f32.mrf.mxu0
        %v2307 = vadd.f32 0.0, %v2306
        %v2308 = vpop.f32.mrf.mxu0
        %v2309 = vpop.f32.mrf.mxu0
        %v2310 = vpop.f32.mrf.mxu0
        %2311 = vdwg.mxu0
        %v2312 = vadd.f32 %v2078, %v2307
        %2313 = vst.msk [vmem:[%s534] sm:$0xff] %vm542, %v2312
        %s2314 = sand.u32 %s318, 1
        %s2315 = scalar_lea.sflag [#allocation4], %s2314
        %s2316 = sand.u32 %s318, 1
        %s2317 = smul.addr %s2316, 8
        %s2318 = scalar_lea.vmem [#allocation16], %s2317
        // Predicated region
        $region105: #{tpu_custom_call.1} parent=71 // pred_check
          %p2319 = pneg %p328
        $region106: #{tpu_custom_call.1} parent=71 // pred_check_branch
          %2321 = sbr.rel (%p2319) target = $region108
        $region107: #{tpu_custom_call.1} parent=71 // pred_region
          %s2323 = ssub.s32 128, 128
          %2324 = vsyncadd %s2315, %s2323
          %s2325 = smul.addr %s32, 128
          %s2326 = scalar_lea.hbm %s13, %s2325
          %s2328 = sshll.u32 %s2318, 4
          %s2329 = int_to_ptr.vmem [resolvable:$true] %s2328
          %2331 = dma.vmem_to_hbm [thread:$0]  %s2329, 128, %s2326, %s2315
        $region108: #{tpu_custom_call.1} parent=71 // pred_fallthru
          _
      $region72: #{tpu_custom_call.1} parent=5 // pred_fallthru
        _
      %p2332 = scmp.le.s32.totalorder 2, %s27
      // Predicated region
      $region109: #{tpu_custom_call.1} parent=5 // pred_check
        %p2333 = pneg %p2332
      $region110: #{tpu_custom_call.1} parent=5 // pred_check_branch
        %2335 = sbr.rel (%p2333) target = $region112
      $region111: #{tpu_custom_call.1} parent=5 // pred_region
        %s2336 = ssub.s32 %s27, 2
        // Predicated region
        $region113: #{tpu_custom_call.1} parent=111 // pred_check
          %p2337 = pneg %p334
        $region114: #{tpu_custom_call.1} parent=111 // pred_check_branch
          %2339 = sbr.rel (%p2337) target = $region116
        $region115: #{tpu_custom_call.1} parent=111 // pred_region
          %s2340 = sand.u32 %s319, 1
          %s2341 = scalar_lea.sflag [#allocation4], %s2340
          %s2342 = sand.u32 %s319, 1
          %s2343 = smul.addr %s2342, 8
          %s2344 = scalar_lea.vmem [#allocation16], %s2343
          %2345 = dma.done %s2341, 128
        $region116: #{tpu_custom_call.1} parent=111 // pred_fallthru
          _
      $region112: #{tpu_custom_call.1} parent=5 // pred_fallthru
        _
    $region6: #{tpu_custom_call.1} parent=1 // loop_footer
      %s31 = sadd.s32 1, %s27
    $region7: #{tpu_custom_call.1} parent=1 // loop_footer_branch
      %26 = sbr.rel target = $region3
    $region8: #{tpu_custom_call.1} parent=1 // loop_exit
      _
    %2346 = vsyncpa [#allocation3], 1
    %s2347 = scalar_lea.sflag [#allocation3], 1
    %2348 = vsyncpa %s2347, 1
    %2349 = vsyncpa [#allocation6], 1
    %2350 = vsyncpa [#allocation9], 1
    %2351 = vsyncpa [#allocation12], 1
    %2352 = vsyncpa [#allocation15], 1
    %2353 = vsyncpa [#allocation4], 1
    %s2354 = scalar_lea.sflag [#allocation4], 1
    %2355 = vsyncpa %s2354, 1

</llo_original>
